<compile_context>
chip_gen: v7x
topology: tpu7x:2x2x1
jax: 0.10.0
libtpu: 0.0.40
codegen_flags: <defaults>
</compile_context>

<pallas_src>
import jax
import jax.numpy as jnp
from jax.experimental import pallas as pl
from jax.experimental.pallas import tpu as pltpu


def se_bottleneck_kernel(x_ref, w1t_ref, b1_ref, w2_ref, b2_ref, o_ref):
    # Global average pool: lane-axis sum with f32 accumulation.  The 1/HW mean
    # factor is already folded into w1t, so a plain sum suffices.  x_ref is
    # re-read later rather than held live across the MLP (avoids vreg spills).
    s = jnp.sum(x_ref[...], axis=-1, dtype=jnp.float32)              # (Bblk, C)

    # linear1 + ReLU: contract on C against the pre-transposed (Chid, C) weight.
    h = jax.lax.dot_general(
        s, w1t_ref[...],
        dimension_numbers=(((1,), (1,)), ((), ())),
        preferred_element_type=jnp.float32,
    ) + b1_ref[...]                                                  # (Bblk, Chid)
    h = jnp.maximum(h, 0.0)

    # linear2 + Sigmoid (exp lands on the EUP slot, effectively free).
    g = jnp.dot(h, w2_ref[...], preferred_element_type=jnp.float32) + b2_ref[...]
    g = jax.nn.sigmoid(g).astype(o_ref.dtype)                        # (Bblk, C)

    # Channel gate: broadcast g along the lane (HW) axis; re-read x from VMEM
    # (3-wide vld slot, free under the HBM-bound stream), store in input dtype.
    # TODO(synk): if bundle profiling ever shows the g relayout (XLU) on the
    # critical path, compute the second matmul transposed so g lands (C, Bblk).
    o_ref[...] = x_ref[...] * g[:, :, None]


def _tpu_gen_params():
    """Generation-aware block / VMEM budgets."""
    kind = ""
    try:
        kind = jax.devices()[0].device_kind.lower()
    except Exception:
        pass
    if "v7" in kind:
        # v7x: 2 TensorCores share only 64 MiB VMEM -> keep the double-buffered
        # working set well under ~48 MiB and keep the grid a multiple of 2.
        return dict(num_tc=2, target_cap=10 << 20,
                    soft_budget=44 << 20, hard_cap=56 << 20)
    # v5e / v6e: single TensorCore, 128 MiB physical VMEM -> biggest legal block.
    return dict(num_tc=1, target_cap=16 << 20,
                soft_budget=96 << 20, hard_cap=100 << 20)


def _pick_batch_block(batch, bytes_per_image, target_bytes, num_tc):
    """Largest divisor of `batch` whose block fits `target_bytes`.

    On multi-TC parts (v7x) additionally keep the grid a multiple of num_tc so
    both cores get balanced work.  On single-TC parts (v5e/v6e) the grid is a
    sequential loop, so we never shrink the block just to get more steps.
    """
    divisors = sorted(d for d in range(1, batch + 1) if batch % d == 0)
    bblk = 1
    for d in divisors:
        if d * bytes_per_image <= target_bytes:
            bblk = d
    if num_tc > 1 and batch % num_tc == 0:
        while bblk > 1 and (batch // bblk) % num_tc != 0:
            bblk = max(d for d in divisors if d < bblk)
    # TODO(synk): for prime/odd batch sizes this degrades to bblk=1; a cdiv grid
    # with a masked tail block would keep blocks big for awkward batch sizes.
    return bblk


def se_bottleneck(x_nchw, w1, b1, w2, b2, *, donate_input=False):
    """x_nchw: (B, C, H, W); w1: (C, Chid); b1: (Chid,); w2: (Chid, C); b2: (C,)."""
    B, C, H, W = x_nchw.shape
    HW = H * W
    Chid = w1.shape[1]

    # Free reshape of contiguous NCHW: channels on sublanes, spatial on lanes.
    # NOTE: production SE shapes often have HW not a multiple of 128 (49, 196,
    # 784, ...); keep activations lane-padded upstream where possible so the
    # output stores stay dense (unmasked vst) -- the biggest store-side lever.
    x = x_nchw.reshape(B, C, HW)

    gen = _tpu_gen_params()
    itemsize = x.dtype.itemsize
    bytes_per_image = C * HW * itemsize
    weight_bytes = (2 * Chid * C + Chid + C) * 4
    headroom = 2 << 20

    # Per-block byte target: roughly (VMEM budget - weights) / 4 (double-
    # buffered in + out), capped per generation.
    target_bytes = min(
        gen["target_cap"],
        max((gen["soft_budget"] - 2 * weight_bytes - 2 * headroom) // 4, 1 << 20),
    )
    bblk = _pick_batch_block(B, bytes_per_image, target_bytes, gen["num_tc"])
    grid = B // bblk

    block_bytes = bblk * bytes_per_image
    # Double-buffered in + out blocks plus weights and headroom; never cap the
    # limit below the actual requirement (that would break big single-image
    # blocks), only below the generation's safe physical ceiling.
    vmem_required = 4 * block_bytes + 2 * weight_bytes + headroom
    vmem_limit = int(min(max(vmem_required, 16 << 20), gen["hard_cap"]))
    assert vmem_required <= vmem_limit, (
        f"SE working set {vmem_required} B exceeds VMEM cap {vmem_limit} B; "
        "this shape needs HW/C tiling as well.")

    # Fold the 1/HW mean scale into the pre-transposed, lane-dense weight.
    w1t = (jnp.transpose(w1) * (1.0 / HW)).astype(jnp.float32)       # (Chid, C)
    w2f = w2.astype(jnp.float32)
    b1_2d = b1.reshape(1, Chid).astype(jnp.float32)
    b2_2d = b2.reshape(1, C).astype(jnp.float32)

    cost = pl.CostEstimate(
        flops=int(4 * B * C * Chid + 2 * B * C * HW),
        transcendentals=int(B * C),
        bytes_accessed=int(2 * B * C * HW * itemsize + weight_bytes),
    )

    out = pl.pallas_call(
        se_bottleneck_kernel,
        out_shape=jax.ShapeDtypeStruct((B, C, HW), x.dtype),
        grid_spec=pltpu.PrefetchScalarGridSpec(
            num_scalar_prefetch=0,
            grid=(grid,),
            in_specs=[
                pl.BlockSpec((bblk, C, HW), lambda b: (b, 0, 0)),    # x
                pl.BlockSpec((Chid, C), lambda b: (0, 0)),           # w1^T / HW
                pl.BlockSpec((1, Chid), lambda b: (0, 0)),           # b1
                pl.BlockSpec((Chid, C), lambda b: (0, 0)),           # w2
                pl.BlockSpec((1, C), lambda b: (0, 0)),              # b2
            ],
            out_specs=pl.BlockSpec((bblk, C, HW), lambda b: (b, 0, 0)),
        ),
        compiler_params=pltpu.CompilerParams(
            dimension_semantics=("parallel",),
            vmem_limit_bytes=vmem_limit,
        ),
        cost_estimate=cost,
        # Output block index == input block index and the block is fully read
        # before it is written, so aliasing x -> out is safe; it halves the HBM
        # footprint when the caller actually donates x.
        input_output_aliases=({0: 0} if donate_input else {}),
    )(x, w1t, b1_2d, w2f, b2_2d)

    # Free reshape back to NCHW.
    return out.reshape(B, C, H, W)


def se_bottleneck_ref(x_nchw, w1, b1, w2, b2):
    """Pure-JAX reference mirroring the PyTorch forward."""
    s = jnp.mean(x_nchw, axis=(2, 3))                 # avg pool + flatten
    h = jnp.maximum(s @ w1 + b1, 0.0)                 # linear1 + ReLU
    g = jax.nn.sigmoid(h @ w2 + b2)                   # linear2 + Sigmoid
    return g[:, :, None, None] * x_nchw               # reshape (-1, C, 1, 1) * input


if __name__ == "__main__":
    # Shapes implied by the module: in_shape = (C, H, W), filters == C so the
    # broadcast multiply is valid.  HW = 256 keeps the lane dim a 128-multiple.
    B, C, H, W = 4, 128, 16, 16
    ratio = 16
    Chid = C // ratio                                  # filters // ratio

    key = jax.random.PRNGKey(0)
    kx, k1, k2, k3, k4 = jax.random.split(key, 5)

    x = jax.random.normal(kx, (B, C, H, W), dtype=jnp.float32)

    # Deterministic parameter init (PyTorch Linear-style uniform bounds).
    bound1 = 1.0 / jnp.sqrt(C)
    w1 = jax.random.uniform(k1, (C, Chid), jnp.float32, -bound1, bound1)
    b1 = jax.random.uniform(k2, (Chid,), jnp.float32, -bound1, bound1)
    bound2 = 1.0 / jnp.sqrt(Chid)
    w2 = jax.random.uniform(k3, (Chid, C), jnp.float32, -bound2, bound2)
    b2 = jax.random.uniform(k4, (C,), jnp.float32, -bound2, bound2)

    out = se_bottleneck(x, w1, b1, w2, b2)
    out = jax.block_until_ready(out)

    ref = se_bottleneck_ref(x, w1, b1, w2, b2)
    assert out.shape == (B, C, H, W)
    assert jnp.allclose(out, ref, atol=1e-5, rtol=1e-5), "mismatch vs reference"

    print("KERNEL_OK")
</pallas_src>

<mosaic_0001>
module attributes {stable_mosaic.version = 11 : i64} {
  func.func @se_bottleneck_kernel(%arg0: i32, %arg1: memref<4x128x256xf32, #tpu.memory_space<vmem>>, %arg2: memref<8x128xf32, #tpu.memory_space<vmem>>, %arg3: memref<1x8xf32, #tpu.memory_space<vmem>>, %arg4: memref<8x128xf32, #tpu.memory_space<vmem>>, %arg5: memref<1x128xf32, #tpu.memory_space<vmem>>, %arg6: memref<4x128x256xf32, #tpu.memory_space<vmem>>) attributes {dimension_semantics = [#tpu.dimension_semantics<parallel>], iteration_bounds = array<i64: 1>, scalar_prefetch = 0 : i64, scratch_operands = 0 : i64, tpu.core_type = #tpu.core_type<tc>, window_params = [{transform_indices = @transform_0, window_bounds = array<i64: 4, 128, 256>}, {pipeline_mode = #tpu.pipeline_mode<synchronous>, transform_indices = @transform_1, window_bounds = array<i64: 8, 128>}, {pipeline_mode = #tpu.pipeline_mode<synchronous>, transform_indices = @transform_2, window_bounds = array<i64: 1, 8>}, {pipeline_mode = #tpu.pipeline_mode<synchronous>, transform_indices = @transform_3, window_bounds = array<i64: 8, 128>}, {pipeline_mode = #tpu.pipeline_mode<synchronous>, transform_indices = @transform_4, window_bounds = array<i64: 1, 128>}, {transform_indices = @transform_5, window_bounds = array<i64: 4, 128, 256>}]} {
    %c0 = arith.constant 0 : index
    %c0_0 = arith.constant 0 : index
    %c0_1 = arith.constant 0 : index
    %0 = vector.load %arg1[%c0, %c0_0, %c0_1] : memref<4x128x256xf32, #tpu.memory_space<vmem>>, vector<4x128x256xf32>
    %cst = arith.constant dense<0.000000e+00> : vector<4x128xf32>
    %1 = vector.multi_reduction <add>, %0, %cst [2] : vector<4x128x256xf32> to vector<4x128xf32>
    %c0_2 = arith.constant 0 : index
    %c0_3 = arith.constant 0 : index
    %2 = vector.load %arg2[%c0_2, %c0_3] : memref<8x128xf32, #tpu.memory_space<vmem>>, vector<8x128xf32>
    %cst_4 = arith.constant dense<0.000000e+00> : vector<4x8xf32>
    %3 = tpu.matmul %1, %2, %cst_4 {dimension_numbers = #tpu.dot_dimension_numbers<[1], [1], [0], [0], [0, 0, 1, 0], [], []>} : vector<4x128xf32>, vector<8x128xf32>, vector<4x8xf32> -> vector<4x8xf32>
    %c0_5 = arith.constant 0 : index
    %c0_6 = arith.constant 0 : index
    %4 = vector.load %arg3[%c0_5, %c0_6] : memref<1x8xf32, #tpu.memory_space<vmem>>, vector<1x8xf32>
    %5 = vector.broadcast %4 : vector<1x8xf32> to vector<4x8xf32>
    %6 = arith.addf %3, %5 : vector<4x8xf32>
    %cst_7 = arith.constant 0.000000e+00 : f32
    %7 = vector.broadcast %cst_7 : f32 to vector<4x8xf32>
    %8 = arith.maximumf %6, %7 : vector<4x8xf32>
    %c0_8 = arith.constant 0 : index
    %c0_9 = arith.constant 0 : index
    %9 = vector.load %arg4[%c0_8, %c0_9] : memref<8x128xf32, #tpu.memory_space<vmem>>, vector<8x128xf32>
    %cst_10 = arith.constant dense<0.000000e+00> : vector<4x128xf32>
    %10 = tpu.matmul %8, %9, %cst_10 {dimension_numbers = #tpu.dot_dimension_numbers<[1], [0], [0], [1], [0, 0, 1, 1], [], []>} : vector<4x8xf32>, vector<8x128xf32>, vector<4x128xf32> -> vector<4x128xf32>
    %c0_11 = arith.constant 0 : index
    %c0_12 = arith.constant 0 : index
    %11 = vector.load %arg5[%c0_11, %c0_12] : memref<1x128xf32, #tpu.memory_space<vmem>>, vector<1x128xf32>
    %12 = vector.broadcast %11 : vector<1x128xf32> to vector<4x128xf32>
    %13 = arith.addf %10, %12 : vector<4x128xf32>
    %14 = arith.negf %13 : vector<4x128xf32>
    %15 = math.exp %14 : vector<4x128xf32>
    %cst_13 = arith.constant 1.000000e+00 : f32
    %16 = vector.broadcast %cst_13 : f32 to vector<4x128xf32>
    %17 = arith.addf %16, %15 : vector<4x128xf32>
    %18 = arith.divf %16, %17 : vector<4x128xf32>
    %c0_14 = arith.constant 0 : index
    %c0_15 = arith.constant 0 : index
    %c0_16 = arith.constant 0 : index
    %19 = vector.load %arg1[%c0_14, %c0_15, %c0_16] : memref<4x128x256xf32, #tpu.memory_space<vmem>>, vector<4x128x256xf32>
    %20 = vector.shape_cast %18 : vector<4x128xf32> to vector<4x128x1xf32>
    %21 = vector.broadcast %20 : vector<4x128x1xf32> to vector<4x128x256xf32>
    %22 = arith.mulf %19, %21 : vector<4x128x256xf32>
    %c0_17 = arith.constant 0 : index
    %c0_18 = arith.constant 0 : index
    %c0_19 = arith.constant 0 : index
    %23 = vector.load %arg6[%c0_17, %c0_18, %c0_19] : memref<4x128x256xf32, #tpu.memory_space<vmem>>, vector<4x128x256xf32>
    tpu.vector_store %arg6[%c0_17, %c0_18, %c0_19], %22 {strides = array<i32>} : memref<4x128x256xf32, #tpu.memory_space<vmem>>, vector<4x128x256xf32>,
    return
  }
  func.func @transform_0(%arg0: i32) -> (i32, i32, i32) {
    %c0_i32 = arith.constant 0 : i32
    %c0_i32_0 = arith.constant 0 : i32
    %c0_i32_1 = arith.constant 0 : i32
    return %arg0, %c0_i32, %c0_i32_0 : i32, i32, i32
  }
  func.func @transform_1(%arg0: i32) -> (i32, i32) {
    %c0_i32 = arith.constant 0 : i32
    %c0_i32_0 = arith.constant 0 : i32
    %c0_i32_1 = arith.constant 0 : i32
    return %c0_i32, %c0_i32_0 : i32, i32
  }
  func.func @transform_2(%arg0: i32) -> (i32, i32) {
    %c0_i32 = arith.constant 0 : i32
    %c0_i32_0 = arith.constant 0 : i32
    %c0_i32_1 = arith.constant 0 : i32
    return %c0_i32, %c0_i32_0 : i32, i32
  }
  func.func @transform_3(%arg0: i32) -> (i32, i32) {
    %c0_i32 = arith.constant 0 : i32
    %c0_i32_0 = arith.constant 0 : i32
    %c0_i32_1 = arith.constant 0 : i32
    return %c0_i32, %c0_i32_0 : i32, i32
  }
  func.func @transform_4(%arg0: i32) -> (i32, i32) {
    %c0_i32 = arith.constant 0 : i32
    %c0_i32_0 = arith.constant 0 : i32
    %c0_i32_1 = arith.constant 0 : i32
    return %c0_i32, %c0_i32_0 : i32, i32
  }
  func.func @transform_5(%arg0: i32) -> (i32, i32, i32) {
    %c0_i32 = arith.constant 0 : i32
    %c0_i32_0 = arith.constant 0 : i32
    %c0_i32_1 = arith.constant 0 : i32
    return %arg0, %c0_i32, %c0_i32_0 : i32, i32, i32
  }
}

</mosaic_0001>

<llo_original>
// kernel: tpu_custom_call.1
$region0: #{tpu_custom_call.1}
  #allocation0 [shape = 'u32[]', space=smem, size = 0x4, offset = 0x4, fixed_abs, tag = 'smem constant byte address 0x4 - core index']
  #allocation1 [shape = 'u32[144,128]{1,0:T(1,128)}', space=vmem, size = 0x12000, scoped, tag = 'internal scratch']
  %s0 = inlined_call_operand.hbm [shape: f32[4,128,256], index: 0, kind: input, shape index: {}]
  %s1 = inlined_call_operand.hbm [shape: f32[8,128], index: 1, kind: input, shape index: {}]
  %s2 = inlined_call_operand.vmem [shape: f32[1,8], index: 2, kind: input, shape index: {}]
  %s3 = inlined_call_operand.vmem [shape: f32[8,128], index: 3, kind: input, shape index: {}]
  %s4 = inlined_call_operand.vmem [shape: f32[1,128], index: 4, kind: input, shape index: {}]
  %s5 = inlined_call_operand.hbm [shape: f32[4,128,256], index: 5, kind: output, shape index: {}]
  %s6 = sld [smem:[#allocation0]]
  $region38: #{tpu_custom_call.1} parent=0
    _
  %s8 = ssub.s32 1, %s6
  %s9 = scalar_select 0, %s8, %s6
  $region1: #{tpu_custom_call.1} parent=0
    #allocation2 [shape = 'u8[524288]{0}', space=vmem, size = 0x80000, scoped, tag = 'input window, operand 0, single buffered']
    #allocation3 [shape = 's32[1]{0}', space=sflag, size = 0x4, scoped, tag = 'scoped memory for tpu_custom_call.1']
    #allocation4 [shape = 's32[1]{0}', space=sflag, size = 0x4, scoped, tag = 'scoped memory for tpu_custom_call.1']
    #allocation5 [shape = 'u8[4096]{0}', space=vmem, size = 0x1000, scoped, tag = 'input window, operand 1, single buffered']
    #allocation6 [shape = 's32[1]{0}', space=sflag, size = 0x4, scoped, tag = 'scoped memory for tpu_custom_call.1']
    #allocation7 [shape = 'u8[524288]{0}', space=vmem, size = 0x80000, scoped, tag = 'output window, operand 0, single buffered']
    %10 = vsyncpa [#allocation3], 0
    %11 = vsyncpa [#allocation6], 0
    %12 = vsyncpa [#allocation4], 0
    // Predicated region
    $region2: #{tpu_custom_call.1} parent=1 // pred_check
      _
    $region3: #{tpu_custom_call.1} parent=1 // pred_check_branch
      %14 = sbr.rel (0) target = $region5
    $region4: #{tpu_custom_call.1} parent=1 // pred_region
      %s16 = ssub.s32 16384, 16384
      %17 = vsyncadd [#allocation3], %s16
      %s18 = sshll.u32 [#allocation2], 4
      %s19 = int_to_ptr.vmem [resolvable:$true] %s18
      %24 = dma.hbm_to_vmem [thread:$0]  %s0, 16384, %s19, [#allocation3], 256, 256, 16
    $region5: #{tpu_custom_call.1} parent=1 // pred_fallthru
      _
    // Predicated region
    $region6: #{tpu_custom_call.1} parent=1 // pred_check
      _
    $region7: #{tpu_custom_call.1} parent=1 // pred_check_branch
      %26 = sbr.rel (0) target = $region9
    $region8: #{tpu_custom_call.1} parent=1 // pred_region
      %s28 = ssub.s32 128, 128
      %29 = vsyncadd [#allocation6], %s28
      %s31 = sshll.u32 [#allocation5], 4
      %s32 = int_to_ptr.vmem [resolvable:$true] %s31
      %34 = dma.hbm_to_vmem [thread:$0]  %s1, 128, %s32, [#allocation6]
    $region9: #{tpu_custom_call.1} parent=1 // pred_fallthru
      _
    // Predicated region
    $region10: #{tpu_custom_call.1} parent=1 // pred_check
      _
    $region11: #{tpu_custom_call.1} parent=1 // pred_check_branch
      %36 = sbr.rel (0) target = $region13
    $region12: #{tpu_custom_call.1} parent=1 // pred_region
      _
    $region13: #{tpu_custom_call.1} parent=1 // pred_fallthru
      _
    // Predicated region
    $region14: #{tpu_custom_call.1} parent=1 // pred_check
      _
    $region15: #{tpu_custom_call.1} parent=1 // pred_check_branch
      %38 = sbr.rel (0) target = $region17
    $region16: #{tpu_custom_call.1} parent=1 // pred_region
      _
    $region17: #{tpu_custom_call.1} parent=1 // pred_fallthru
      _
    // Predicated region
    $region18: #{tpu_custom_call.1} parent=1 // pred_check
      _
    $region19: #{tpu_custom_call.1} parent=1 // pred_check_branch
      %40 = sbr.rel (0) target = $region21
    $region20: #{tpu_custom_call.1} parent=1 // pred_region
      _
    $region21: #{tpu_custom_call.1} parent=1 // pred_fallthru
      _
    // Predicated region
    $region22: #{tpu_custom_call.1} parent=1 // pred_check
      _
    $region23: #{tpu_custom_call.1} parent=1 // pred_check_branch
      %42 = sbr.rel (0) target = $region25
    $region24: #{tpu_custom_call.1} parent=1 // pred_region
      %43 = dma.done [#allocation3], 16384
    $region25: #{tpu_custom_call.1} parent=1 // pred_fallthru
      _
    // Predicated region
    $region26: #{tpu_custom_call.1} parent=1 // pred_check
      _
    $region27: #{tpu_custom_call.1} parent=1 // pred_check_branch
      %45 = sbr.rel (0) target = $region29
    $region28: #{tpu_custom_call.1} parent=1 // pred_region
      %46 = dma.done [#allocation6], 128
    $region29: #{tpu_custom_call.1} parent=1 // pred_fallthru
      _
    %v47 = vld [vmem:[#allocation2] sm:$0xff]
    %v48 = vld [vmem:[#allocation2 + $0x8] sm:$0xff]
    %v49 = vld [vmem:[#allocation2 + $0x10] sm:$0xff]
    %v50 = vld [vmem:[#allocation2 + $0x18] sm:$0xff]
    %v51 = vld [vmem:[#allocation2 + $0x20] sm:$0xff]
    %v52 = vld [vmem:[#allocation2 + $0x28] sm:$0xff]
    %v53 = vld [vmem:[#allocation2 + $0x30] sm:$0xff]
    %v54 = vld [vmem:[#allocation2 + $0x38] sm:$0xff]
    %v55 = vld [vmem:[#allocation2 + $0x40] sm:$0xff]
    %v56 = vld [vmem:[#allocation2 + $0x48] sm:$0xff]
    %v57 = vld [vmem:[#allocation2 + $0x50] sm:$0xff]
    %v58 = vld [vmem:[#allocation2 + $0x58] sm:$0xff]
    %v59 = vld [vmem:[#allocation2 + $0x60] sm:$0xff]
    %v60 = vld [vmem:[#allocation2 + $0x68] sm:$0xff]
    %v61 = vld [vmem:[#allocation2 + $0x70] sm:$0xff]
    %v62 = vld [vmem:[#allocation2 + $0x78] sm:$0xff]
    %v63 = vld [vmem:[#allocation2 + $0x80] sm:$0xff]
    %v64 = vld [vmem:[#allocation2 + $0x88] sm:$0xff]
    %v65 = vld [vmem:[#allocation2 + $0x90] sm:$0xff]
    %v66 = vld [vmem:[#allocation2 + $0x98] sm:$0xff]
    %v67 = vld [vmem:[#allocation2 + $0xa0] sm:$0xff]
    %v68 = vld [vmem:[#allocation2 + $0xa8] sm:$0xff]
    %v69 = vld [vmem:[#allocation2 + $0xb0] sm:$0xff]
    %v70 = vld [vmem:[#allocation2 + $0xb8] sm:$0xff]
    %v71 = vld [vmem:[#allocation2 + $0xc0] sm:$0xff]
    %v72 = vld [vmem:[#allocation2 + $0xc8] sm:$0xff]
    %v73 = vld [vmem:[#allocation2 + $0xd0] sm:$0xff]
    %v74 = vld [vmem:[#allocation2 + $0xd8] sm:$0xff]
    %v75 = vld [vmem:[#allocation2 + $0xe0] sm:$0xff]
    %v76 = vld [vmem:[#allocation2 + $0xe8] sm:$0xff]
    %v77 = vld [vmem:[#allocation2 + $0xf0] sm:$0xff]
    %v78 = vld [vmem:[#allocation2 + $0xf8] sm:$0xff]
    %v79 = vld [vmem:[#allocation2 + $0x100] sm:$0xff]
    %v80 = vld [vmem:[#allocation2 + $0x108] sm:$0xff]
    %v81 = vld [vmem:[#allocation2 + $0x110] sm:$0xff]
    %v82 = vld [vmem:[#allocation2 + $0x118] sm:$0xff]
    %v83 = vld [vmem:[#allocation2 + $0x120] sm:$0xff]
    %v84 = vld [vmem:[#allocation2 + $0x128] sm:$0xff]
    %v85 = vld [vmem:[#allocation2 + $0x130] sm:$0xff]
    %v86 = vld [vmem:[#allocation2 + $0x138] sm:$0xff]
    %v87 = vld [vmem:[#allocation2 + $0x140] sm:$0xff]
    %v88 = vld [vmem:[#allocation2 + $0x148] sm:$0xff]
    %v89 = vld [vmem:[#allocation2 + $0x150] sm:$0xff]
    %v90 = vld [vmem:[#allocation2 + $0x158] sm:$0xff]
    %v91 = vld [vmem:[#allocation2 + $0x160] sm:$0xff]
    %v92 = vld [vmem:[#allocation2 + $0x168] sm:$0xff]
    %v93 = vld [vmem:[#allocation2 + $0x170] sm:$0xff]
    %v94 = vld [vmem:[#allocation2 + $0x178] sm:$0xff]
    %v95 = vld [vmem:[#allocation2 + $0x180] sm:$0xff]
    %v96 = vld [vmem:[#allocation2 + $0x188] sm:$0xff]
    %v97 = vld [vmem:[#allocation2 + $0x190] sm:$0xff]
    %v98 = vld [vmem:[#allocation2 + $0x198] sm:$0xff]
    %v99 = vld [vmem:[#allocation2 + $0x1a0] sm:$0xff]
    %v100 = vld [vmem:[#allocation2 + $0x1a8] sm:$0xff]
    %v101 = vld [vmem:[#allocation2 + $0x1b0] sm:$0xff]
    %v102 = vld [vmem:[#allocation2 + $0x1b8] sm:$0xff]
    %v103 = vld [vmem:[#allocation2 + $0x1c0] sm:$0xff]
    %v104 = vld [vmem:[#allocation2 + $0x1c8] sm:$0xff]
    %v105 = vld [vmem:[#allocation2 + $0x1d0] sm:$0xff]
    %v106 = vld [vmem:[#allocation2 + $0x1d8] sm:$0xff]
    %v107 = vld [vmem:[#allocation2 + $0x1e0] sm:$0xff]
    %v108 = vld [vmem:[#allocation2 + $0x1e8] sm:$0xff]
    %v109 = vld [vmem:[#allocation2 + $0x1f0] sm:$0xff]
    %v110 = vld [vmem:[#allocation2 + $0x1f8] sm:$0xff]
    %v111 = vld [vmem:[#allocation2 + $0x200] sm:$0xff]
    %v112 = vld [vmem:[#allocation2 + $0x208] sm:$0xff]
    %v113 = vld [vmem:[#allocation2 + $0x210] sm:$0xff]
    %v114 = vld [vmem:[#allocation2 + $0x218] sm:$0xff]
    %v115 = vld [vmem:[#allocation2 + $0x220] sm:$0xff]
    %v116 = vld [vmem:[#allocation2 + $0x228] sm:$0xff]
    %v117 = vld [vmem:[#allocation2 + $0x230] sm:$0xff]
    %v118 = vld [vmem:[#allocation2 + $0x238] sm:$0xff]
    %v119 = vld [vmem:[#allocation2 + $0x240] sm:$0xff]
    %v120 = vld [vmem:[#allocation2 + $0x248] sm:$0xff]
    %v121 = vld [vmem:[#allocation2 + $0x250] sm:$0xff]
    %v122 = vld [vmem:[#allocation2 + $0x258] sm:$0xff]
    %v123 = vld [vmem:[#allocation2 + $0x260] sm:$0xff]
    %v124 = vld [vmem:[#allocation2 + $0x268] sm:$0xff]
    %v125 = vld [vmem:[#allocation2 + $0x270] sm:$0xff]
    %v126 = vld [vmem:[#allocation2 + $0x278] sm:$0xff]
    %v127 = vld [vmem:[#allocation2 + $0x280] sm:$0xff]
    %v128 = vld [vmem:[#allocation2 + $0x288] sm:$0xff]
    %v129 = vld [vmem:[#allocation2 + $0x290] sm:$0xff]
    %v130 = vld [vmem:[#allocation2 + $0x298] sm:$0xff]
    %v131 = vld [vmem:[#allocation2 + $0x2a0] sm:$0xff]
    %v132 = vld [vmem:[#allocation2 + $0x2a8] sm:$0xff]
    %v133 = vld [vmem:[#allocation2 + $0x2b0] sm:$0xff]
    %v134 = vld [vmem:[#allocation2 + $0x2b8] sm:$0xff]
    %v135 = vld [vmem:[#allocation2 + $0x2c0] sm:$0xff]
    %v136 = vld [vmem:[#allocation2 + $0x2c8] sm:$0xff]
    %v137 = vld [vmem:[#allocation2 + $0x2d0] sm:$0xff]
    %v138 = vld [vmem:[#allocation2 + $0x2d8] sm:$0xff]
    %v139 = vld [vmem:[#allocation2 + $0x2e0] sm:$0xff]
    %v140 = vld [vmem:[#allocation2 + $0x2e8] sm:$0xff]
    %v141 = vld [vmem:[#allocation2 + $0x2f0] sm:$0xff]
    %v142 = vld [vmem:[#allocation2 + $0x2f8] sm:$0xff]
    %v143 = vld [vmem:[#allocation2 + $0x300] sm:$0xff]
    %v144 = vld [vmem:[#allocation2 + $0x308] sm:$0xff]
    %v145 = vld [vmem:[#allocation2 + $0x310] sm:$0xff]
    %v146 = vld [vmem:[#allocation2 + $0x318] sm:$0xff]
    %v147 = vld [vmem:[#allocation2 + $0x320] sm:$0xff]
    %v148 = vld [vmem:[#allocation2 + $0x328] sm:$0xff]
    %v149 = vld [vmem:[#allocation2 + $0x330] sm:$0xff]
    %v150 = vld [vmem:[#allocation2 + $0x338] sm:$0xff]
    %v151 = vld [vmem:[#allocation2 + $0x340] sm:$0xff]
    %v152 = vld [vmem:[#allocation2 + $0x348] sm:$0xff]
    %v153 = vld [vmem:[#allocation2 + $0x350] sm:$0xff]
    %v154 = vld [vmem:[#allocation2 + $0x358] sm:$0xff]
    %v155 = vld [vmem:[#allocation2 + $0x360] sm:$0xff]
    %v156 = vld [vmem:[#allocation2 + $0x368] sm:$0xff]
    %v157 = vld [vmem:[#allocation2 + $0x370] sm:$0xff]
    %v158 = vld [vmem:[#allocation2 + $0x378] sm:$0xff]
    %v159 = vld [vmem:[#allocation2 + $0x380] sm:$0xff]
    %v160 = vld [vmem:[#allocation2 + $0x388] sm:$0xff]
    %v161 = vld [vmem:[#allocation2 + $0x390] sm:$0xff]
    %v162 = vld [vmem:[#allocation2 + $0x398] sm:$0xff]
    %v163 = vld [vmem:[#allocation2 + $0x3a0] sm:$0xff]
    %v164 = vld [vmem:[#allocation2 + $0x3a8] sm:$0xff]
    %v165 = vld [vmem:[#allocation2 + $0x3b0] sm:$0xff]
    %v166 = vld [vmem:[#allocation2 + $0x3b8] sm:$0xff]
    %v167 = vld [vmem:[#allocation2 + $0x3c0] sm:$0xff]
    %v168 = vld [vmem:[#allocation2 + $0x3c8] sm:$0xff]
    %v169 = vld [vmem:[#allocation2 + $0x3d0] sm:$0xff]
    %v170 = vld [vmem:[#allocation2 + $0x3d8] sm:$0xff]
    %v171 = vld [vmem:[#allocation2 + $0x3e0] sm:$0xff]
    %v172 = vld [vmem:[#allocation2 + $0x3e8] sm:$0xff]
    %v173 = vld [vmem:[#allocation2 + $0x3f0] sm:$0xff]
    %v174 = vld [vmem:[#allocation2 + $0x3f8] sm:$0xff]
    %v175 = vadd.f32 %v47, %v48
    %176 = vadd.xlane.f32.xlu0 %v175
    %v177 = vpop.xlane.xlu0 %176
    %v178 = vadd.f32 %v49, %v50
    %179 = vadd.xlane.f32.xlu0 %v178
    %v180 = vpop.xlane.xlu0 %179
    %v181 = vadd.f32 %v51, %v52
    %182 = vadd.xlane.f32.xlu0 %v181
    %v183 = vpop.xlane.xlu0 %182
    %v184 = vadd.f32 %v53, %v54
    %185 = vadd.xlane.f32.xlu0 %v184
    %v186 = vpop.xlane.xlu0 %185
    %v187 = vadd.f32 %v55, %v56
    %188 = vadd.xlane.f32.xlu0 %v187
    %v189 = vpop.xlane.xlu0 %188
    %v190 = vadd.f32 %v57, %v58
    %191 = vadd.xlane.f32.xlu0 %v190
    %v192 = vpop.xlane.xlu0 %191
    %v193 = vadd.f32 %v59, %v60
    %194 = vadd.xlane.f32.xlu0 %v193
    %v195 = vpop.xlane.xlu0 %194
    %v196 = vadd.f32 %v61, %v62
    %197 = vadd.xlane.f32.xlu0 %v196
    %v198 = vpop.xlane.xlu0 %197
    %v199 = vadd.f32 %v63, %v64
    %200 = vadd.xlane.f32.xlu0 %v199
    %v201 = vpop.xlane.xlu0 %200
    %v202 = vadd.f32 %v65, %v66
    %203 = vadd.xlane.f32.xlu0 %v202
    %v204 = vpop.xlane.xlu0 %203
    %v205 = vadd.f32 %v67, %v68
    %206 = vadd.xlane.f32.xlu0 %v205
    %v207 = vpop.xlane.xlu0 %206
    %v208 = vadd.f32 %v69, %v70
    %209 = vadd.xlane.f32.xlu0 %v208
    %v210 = vpop.xlane.xlu0 %209
    %v211 = vadd.f32 %v71, %v72
    %212 = vadd.xlane.f32.xlu0 %v211
    %v213 = vpop.xlane.xlu0 %212
    %v214 = vadd.f32 %v73, %v74
    %215 = vadd.xlane.f32.xlu0 %v214
    %v216 = vpop.xlane.xlu0 %215
    %v217 = vadd.f32 %v75, %v76
    %218 = vadd.xlane.f32.xlu0 %v217
    %v219 = vpop.xlane.xlu0 %218
    %v220 = vadd.f32 %v77, %v78
    %221 = vadd.xlane.f32.xlu0 %v220
    %v222 = vpop.xlane.xlu0 %221
    %v223 = vadd.f32 %v79, %v80
    %224 = vadd.xlane.f32.xlu0 %v223
    %v225 = vpop.xlane.xlu0 %224
    %v226 = vadd.f32 %v81, %v82
    %227 = vadd.xlane.f32.xlu0 %v226
    %v228 = vpop.xlane.xlu0 %227
    %v229 = vadd.f32 %v83, %v84
    %230 = vadd.xlane.f32.xlu0 %v229
    %v231 = vpop.xlane.xlu0 %230
    %v232 = vadd.f32 %v85, %v86
    %233 = vadd.xlane.f32.xlu0 %v232
    %v234 = vpop.xlane.xlu0 %233
    %v235 = vadd.f32 %v87, %v88
    %236 = vadd.xlane.f32.xlu0 %v235
    %v237 = vpop.xlane.xlu0 %236
    %v238 = vadd.f32 %v89, %v90
    %239 = vadd.xlane.f32.xlu0 %v238
    %v240 = vpop.xlane.xlu0 %239
    %v241 = vadd.f32 %v91, %v92
    %242 = vadd.xlane.f32.xlu0 %v241
    %v243 = vpop.xlane.xlu0 %242
    %v244 = vadd.f32 %v93, %v94
    %245 = vadd.xlane.f32.xlu0 %v244
    %v246 = vpop.xlane.xlu0 %245
    %v247 = vadd.f32 %v95, %v96
    %248 = vadd.xlane.f32.xlu0 %v247
    %v249 = vpop.xlane.xlu0 %248
    %v250 = vadd.f32 %v97, %v98
    %251 = vadd.xlane.f32.xlu0 %v250
    %v252 = vpop.xlane.xlu0 %251
    %v253 = vadd.f32 %v99, %v100
    %254 = vadd.xlane.f32.xlu0 %v253
    %v255 = vpop.xlane.xlu0 %254
    %v256 = vadd.f32 %v101, %v102
    %257 = vadd.xlane.f32.xlu0 %v256
    %v258 = vpop.xlane.xlu0 %257
    %v259 = vadd.f32 %v103, %v104
    %260 = vadd.xlane.f32.xlu0 %v259
    %v261 = vpop.xlane.xlu0 %260
    %v262 = vadd.f32 %v105, %v106
    %263 = vadd.xlane.f32.xlu0 %v262
    %v264 = vpop.xlane.xlu0 %263
    %v265 = vadd.f32 %v107, %v108
    %266 = vadd.xlane.f32.xlu0 %v265
    %v267 = vpop.xlane.xlu0 %266
    %v268 = vadd.f32 %v109, %v110
    %269 = vadd.xlane.f32.xlu0 %v268
    %v270 = vpop.xlane.xlu0 %269
    %v271 = vadd.f32 %v111, %v112
    %272 = vadd.xlane.f32.xlu0 %v271
    %v273 = vpop.xlane.xlu0 %272
    %v274 = vadd.f32 %v113, %v114
    %275 = vadd.xlane.f32.xlu0 %v274
    %v276 = vpop.xlane.xlu0 %275
    %v277 = vadd.f32 %v115, %v116
    %278 = vadd.xlane.f32.xlu0 %v277
    %v279 = vpop.xlane.xlu0 %278
    %v280 = vadd.f32 %v117, %v118
    %281 = vadd.xlane.f32.xlu0 %v280
    %v282 = vpop.xlane.xlu0 %281
    %v283 = vadd.f32 %v119, %v120
    %284 = vadd.xlane.f32.xlu0 %v283
    %v285 = vpop.xlane.xlu0 %284
    %v286 = vadd.f32 %v121, %v122
    %287 = vadd.xlane.f32.xlu0 %v286
    %v288 = vpop.xlane.xlu0 %287
    %v289 = vadd.f32 %v123, %v124
    %290 = vadd.xlane.f32.xlu0 %v289
    %v291 = vpop.xlane.xlu0 %290
    %v292 = vadd.f32 %v125, %v126
    %293 = vadd.xlane.f32.xlu0 %v292
    %v294 = vpop.xlane.xlu0 %293
    %v295 = vadd.f32 %v127, %v128
    %296 = vadd.xlane.f32.xlu0 %v295
    %v297 = vpop.xlane.xlu0 %296
    %v298 = vadd.f32 %v129, %v130
    %299 = vadd.xlane.f32.xlu0 %v298
    %v300 = vpop.xlane.xlu0 %299
    %v301 = vadd.f32 %v131, %v132
    %302 = vadd.xlane.f32.xlu0 %v301
    %v303 = vpop.xlane.xlu0 %302
    %v304 = vadd.f32 %v133, %v134
    %305 = vadd.xlane.f32.xlu0 %v304
    %v306 = vpop.xlane.xlu0 %305
    %v307 = vadd.f32 %v135, %v136
    %308 = vadd.xlane.f32.xlu0 %v307
    %v309 = vpop.xlane.xlu0 %308
    %v310 = vadd.f32 %v137, %v138
    %311 = vadd.xlane.f32.xlu0 %v310
    %v312 = vpop.xlane.xlu0 %311
    %v313 = vadd.f32 %v139, %v140
    %314 = vadd.xlane.f32.xlu0 %v313
    %v315 = vpop.xlane.xlu0 %314
    %v316 = vadd.f32 %v141, %v142
    %317 = vadd.xlane.f32.xlu0 %v316
    %v318 = vpop.xlane.xlu0 %317
    %v319 = vadd.f32 %v143, %v144
    %320 = vadd.xlane.f32.xlu0 %v319
    %v321 = vpop.xlane.xlu0 %320
    %v322 = vadd.f32 %v145, %v146
    %323 = vadd.xlane.f32.xlu0 %v322
    %v324 = vpop.xlane.xlu0 %323
    %v325 = vadd.f32 %v147, %v148
    %326 = vadd.xlane.f32.xlu0 %v325
    %v327 = vpop.xlane.xlu0 %326
    %v328 = vadd.f32 %v149, %v150
    %329 = vadd.xlane.f32.xlu0 %v328
    %v330 = vpop.xlane.xlu0 %329
    %v331 = vadd.f32 %v151, %v152
    %332 = vadd.xlane.f32.xlu0 %v331
    %v333 = vpop.xlane.xlu0 %332
    %v334 = vadd.f32 %v153, %v154
    %335 = vadd.xlane.f32.xlu0 %v334
    %v336 = vpop.xlane.xlu0 %335
    %v337 = vadd.f32 %v155, %v156
    %338 = vadd.xlane.f32.xlu0 %v337
    %v339 = vpop.xlane.xlu0 %338
    %v340 = vadd.f32 %v157, %v158
    %341 = vadd.xlane.f32.xlu0 %v340
    %v342 = vpop.xlane.xlu0 %341
    %v343 = vadd.f32 %v159, %v160
    %344 = vadd.xlane.f32.xlu0 %v343
    %v345 = vpop.xlane.xlu0 %344
    %v346 = vadd.f32 %v161, %v162
    %347 = vadd.xlane.f32.xlu0 %v346
    %v348 = vpop.xlane.xlu0 %347
    %v349 = vadd.f32 %v163, %v164
    %350 = vadd.xlane.f32.xlu0 %v349
    %v351 = vpop.xlane.xlu0 %350
    %v352 = vadd.f32 %v165, %v166
    %353 = vadd.xlane.f32.xlu0 %v352
    %v354 = vpop.xlane.xlu0 %353
    %v355 = vadd.f32 %v167, %v168
    %356 = vadd.xlane.f32.xlu0 %v355
    %v357 = vpop.xlane.xlu0 %356
    %v358 = vadd.f32 %v169, %v170
    %359 = vadd.xlane.f32.xlu0 %v358
    %v360 = vpop.xlane.xlu0 %359
    %v361 = vadd.f32 %v171, %v172
    %362 = vadd.xlane.f32.xlu0 %v361
    %v363 = vpop.xlane.xlu0 %362
    %v364 = vadd.f32 %v173, %v174
    %365 = vadd.xlane.f32.xlu0 %v364
    %v366 = vpop.xlane.xlu0 %365
    %v367 = vld [vmem:[#allocation5] sm:$0xff]
    %v368 = vld [vmem:[%s2] sm:$0x1]
    %v370 = vlaneseq
    %v371 = vshrl.u32 %v370, 7
    %v372 = vsub.s32 0, %v371
    %v373 = vrot.slane %v368, %v372
    %v439 = vlaneseq
    %v440 = vand.u32 %v439, 127
    %v441 = vlaneseq
    %v442 = vshrl.u32 %v441, 7
    %v443 = vsub.s32 %v440, %v442
    %v444 = vrot.slane %v177, %v443
    %v445 = vadd.s32 %v440, 4294967288
    %v446 = vlaneseq
    %v447 = vshrl.u32 %v446, 7
    %v448 = vsub.s32 %v445, %v447
    %v449 = vrot.slane %v180, %v448
    %vm450 = vcmask 130112
    %v451 = vsel %vm450, %v449, %v444
    %v452 = vadd.s32 %v440, 4294967280
    %v453 = vlaneseq
    %v454 = vshrl.u32 %v453, 7
    %v455 = vsub.s32 %v452, %v454
    %v456 = vrot.slane %v183, %v455
    %vm457 = vcmask 195712
    %v458 = vsel %vm457, %v456, %v451
    %v459 = vadd.s32 %v440, 4294967272
    %v460 = vlaneseq
    %v461 = vshrl.u32 %v460, 7
    %v462 = vsub.s32 %v459, %v461
    %v463 = vrot.slane %v186, %v462
    %vm464 = vcmask 261312
    %v465 = vsel %vm464, %v463, %v458
    %v466 = vadd.s32 %v440, 4294967264
    %v467 = vlaneseq
    %v468 = vshrl.u32 %v467, 7
    %v469 = vsub.s32 %v466, %v468
    %v470 = vrot.slane %v189, %v469
    %vm471 = vcmask 326912
    %v472 = vsel %vm471, %v470, %v465
    %v473 = vadd.s32 %v440, 4294967256
    %v474 = vlaneseq
    %v475 = vshrl.u32 %v474, 7
    %v476 = vsub.s32 %v473, %v475
    %v477 = vrot.slane %v192, %v476
    %vm478 = vcmask 392512
    %v479 = vsel %vm478, %v477, %v472
    %v480 = vadd.s32 %v440, 4294967248
    %v481 = vlaneseq
    %v482 = vshrl.u32 %v481, 7
    %v483 = vsub.s32 %v480, %v482
    %v484 = vrot.slane %v195, %v483
    %vm485 = vcmask 458112
    %v486 = vsel %vm485, %v484, %v479
    %v487 = vadd.s32 %v440, 4294967240
    %v488 = vlaneseq
    %v489 = vshrl.u32 %v488, 7
    %v490 = vsub.s32 %v487, %v489
    %v491 = vrot.slane %v198, %v490
    %vm492 = vcmask 523712
    %v493 = vsel %vm492, %v491, %v486
    %v494 = vadd.s32 %v440, 4294967232
    %v495 = vlaneseq
    %v496 = vshrl.u32 %v495, 7
    %v497 = vsub.s32 %v494, %v496
    %v498 = vrot.slane %v201, %v497
    %vm499 = vcmask 589312
    %v500 = vsel %vm499, %v498, %v493
    %v501 = vadd.s32 %v440, 4294967224
    %v502 = vlaneseq
    %v503 = vshrl.u32 %v502, 7
    %v504 = vsub.s32 %v501, %v503
    %v505 = vrot.slane %v204, %v504
    %vm506 = vcmask 654912
    %v507 = vsel %vm506, %v505, %v500
    %v508 = vadd.s32 %v440, 4294967216
    %v509 = vlaneseq
    %v510 = vshrl.u32 %v509, 7
    %v511 = vsub.s32 %v508, %v510
    %v512 = vrot.slane %v207, %v511
    %vm513 = vcmask 720512
    %v514 = vsel %vm513, %v512, %v507
    %v515 = vadd.s32 %v440, 4294967208
    %v516 = vlaneseq
    %v517 = vshrl.u32 %v516, 7
    %v518 = vsub.s32 %v515, %v517
    %v519 = vrot.slane %v210, %v518
    %vm520 = vcmask 786112
    %v521 = vsel %vm520, %v519, %v514
    %v522 = vadd.s32 %v440, 4294967200
    %v523 = vlaneseq
    %v524 = vshrl.u32 %v523, 7
    %v525 = vsub.s32 %v522, %v524
    %v526 = vrot.slane %v213, %v525
    %vm527 = vcmask 851712
    %v528 = vsel %vm527, %v526, %v521
    %v529 = vadd.s32 %v440, 4294967192
    %v530 = vlaneseq
    %v531 = vshrl.u32 %v530, 7
    %v532 = vsub.s32 %v529, %v531
    %v533 = vrot.slane %v216, %v532
    %vm534 = vcmask 917312
    %v535 = vsel %vm534, %v533, %v528
    %v536 = vadd.s32 %v440, 4294967184
    %v537 = vlaneseq
    %v538 = vshrl.u32 %v537, 7
    %v539 = vsub.s32 %v536, %v538
    %v540 = vrot.slane %v219, %v539
    %vm541 = vcmask 982912
    %v542 = vsel %vm541, %v540, %v535
    %v543 = vadd.s32 %v440, 4294967176
    %v544 = vlaneseq
    %v545 = vshrl.u32 %v544, 7
    %v546 = vsub.s32 %v543, %v545
    %v547 = vrot.slane %v222, %v546
    %vm548 = vcmask 1048512
    %v549 = vsel %vm548, %v547, %v542
    %v550 = vlaneseq
    %v551 = vshrl.u32 %v550, 7
    %v552 = vsub.s32 %v440, %v551
    %v553 = vrot.slane %v225, %v552
    %v554 = vlaneseq
    %v555 = vshrl.u32 %v554, 7
    %v556 = vsub.s32 %v445, %v555
    %v557 = vrot.slane %v228, %v556
    %v558 = vsel %vm450, %v557, %v553
    %v559 = vlaneseq
    %v560 = vshrl.u32 %v559, 7
    %v561 = vsub.s32 %v452, %v560
    %v562 = vrot.slane %v231, %v561
    %v563 = vsel %vm457, %v562, %v558
    %v564 = vlaneseq
    %v565 = vshrl.u32 %v564, 7
    %v566 = vsub.s32 %v459, %v565
    %v567 = vrot.slane %v234, %v566
    %v568 = vsel %vm464, %v567, %v563
    %v569 = vlaneseq
    %v570 = vshrl.u32 %v569, 7
    %v571 = vsub.s32 %v466, %v570
    %v572 = vrot.slane %v237, %v571
    %v573 = vsel %vm471, %v572, %v568
    %v574 = vlaneseq
    %v575 = vshrl.u32 %v574, 7
    %v576 = vsub.s32 %v473, %v575
    %v577 = vrot.slane %v240, %v576
    %v578 = vsel %vm478, %v577, %v573
    %v579 = vlaneseq
    %v580 = vshrl.u32 %v579, 7
    %v581 = vsub.s32 %v480, %v580
    %v582 = vrot.slane %v243, %v581
    %v583 = vsel %vm485, %v582, %v578
    %v584 = vlaneseq
    %v585 = vshrl.u32 %v584, 7
    %v586 = vsub.s32 %v487, %v585
    %v587 = vrot.slane %v246, %v586
    %v588 = vsel %vm492, %v587, %v583
    %v589 = vlaneseq
    %v590 = vshrl.u32 %v589, 7
    %v591 = vsub.s32 %v494, %v590
    %v592 = vrot.slane %v249, %v591
    %v593 = vsel %vm499, %v592, %v588
    %v594 = vlaneseq
    %v595 = vshrl.u32 %v594, 7
    %v596 = vsub.s32 %v501, %v595
    %v597 = vrot.slane %v252, %v596
    %v598 = vsel %vm506, %v597, %v593
    %v599 = vlaneseq
    %v600 = vshrl.u32 %v599, 7
    %v601 = vsub.s32 %v508, %v600
    %v602 = vrot.slane %v255, %v601
    %v603 = vsel %vm513, %v602, %v598
    %v604 = vlaneseq
    %v605 = vshrl.u32 %v604, 7
    %v606 = vsub.s32 %v515, %v605
    %v607 = vrot.slane %v258, %v606
    %v608 = vsel %vm520, %v607, %v603
    %v609 = vlaneseq
    %v610 = vshrl.u32 %v609, 7
    %v611 = vsub.s32 %v522, %v610
    %v612 = vrot.slane %v261, %v611
    %v613 = vsel %vm527, %v612, %v608
    %v614 = vlaneseq
    %v615 = vshrl.u32 %v614, 7
    %v616 = vsub.s32 %v529, %v615
    %v617 = vrot.slane %v264, %v616
    %v618 = vsel %vm534, %v617, %v613
    %v619 = vlaneseq
    %v620 = vshrl.u32 %v619, 7
    %v621 = vsub.s32 %v536, %v620
    %v622 = vrot.slane %v267, %v621
    %v623 = vsel %vm541, %v622, %v618
    %v624 = vlaneseq
    %v625 = vshrl.u32 %v624, 7
    %v626 = vsub.s32 %v543, %v625
    %v627 = vrot.slane %v270, %v626
    %v628 = vsel %vm548, %v627, %v623
    %v629 = vlaneseq
    %v630 = vshrl.u32 %v629, 7
    %v631 = vsub.s32 %v440, %v630
    %v632 = vrot.slane %v273, %v631
    %v633 = vlaneseq
    %v634 = vshrl.u32 %v633, 7
    %v635 = vsub.s32 %v445, %v634
    %v636 = vrot.slane %v276, %v635
    %v637 = vsel %vm450, %v636, %v632
    %v638 = vlaneseq
    %v639 = vshrl.u32 %v638, 7
    %v640 = vsub.s32 %v452, %v639
    %v641 = vrot.slane %v279, %v640
    %v642 = vsel %vm457, %v641, %v637
    %v643 = vlaneseq
    %v644 = vshrl.u32 %v643, 7
    %v645 = vsub.s32 %v459, %v644
    %v646 = vrot.slane %v282, %v645
    %v647 = vsel %vm464, %v646, %v642
    %v648 = vlaneseq
    %v649 = vshrl.u32 %v648, 7
    %v650 = vsub.s32 %v466, %v649
    %v651 = vrot.slane %v285, %v650
    %v652 = vsel %vm471, %v651, %v647
    %v653 = vlaneseq
    %v654 = vshrl.u32 %v653, 7
    %v655 = vsub.s32 %v473, %v654
    %v656 = vrot.slane %v288, %v655
    %v657 = vsel %vm478, %v656, %v652
    %v658 = vlaneseq
    %v659 = vshrl.u32 %v658, 7
    %v660 = vsub.s32 %v480, %v659
    %v661 = vrot.slane %v291, %v660
    %v662 = vsel %vm485, %v661, %v657
    %v663 = vlaneseq
    %v664 = vshrl.u32 %v663, 7
    %v665 = vsub.s32 %v487, %v664
    %v666 = vrot.slane %v294, %v665
    %v667 = vsel %vm492, %v666, %v662
    %v668 = vlaneseq
    %v669 = vshrl.u32 %v668, 7
    %v670 = vsub.s32 %v494, %v669
    %v671 = vrot.slane %v297, %v670
    %v672 = vsel %vm499, %v671, %v667
    %v673 = vlaneseq
    %v674 = vshrl.u32 %v673, 7
    %v675 = vsub.s32 %v501, %v674
    %v676 = vrot.slane %v300, %v675
    %v677 = vsel %vm506, %v676, %v672
    %v678 = vlaneseq
    %v679 = vshrl.u32 %v678, 7
    %v680 = vsub.s32 %v508, %v679
    %v681 = vrot.slane %v303, %v680
    %v682 = vsel %vm513, %v681, %v677
    %v683 = vlaneseq
    %v684 = vshrl.u32 %v683, 7
    %v685 = vsub.s32 %v515, %v684
    %v686 = vrot.slane %v306, %v685
    %v687 = vsel %vm520, %v686, %v682
    %v688 = vlaneseq
    %v689 = vshrl.u32 %v688, 7
    %v690 = vsub.s32 %v522, %v689
    %v691 = vrot.slane %v309, %v690
    %v692 = vsel %vm527, %v691, %v687
    %v693 = vlaneseq
    %v694 = vshrl.u32 %v693, 7
    %v695 = vsub.s32 %v529, %v694
    %v696 = vrot.slane %v312, %v695
    %v697 = vsel %vm534, %v696, %v692
    %v698 = vlaneseq
    %v699 = vshrl.u32 %v698, 7
    %v700 = vsub.s32 %v536, %v699
    %v701 = vrot.slane %v315, %v700
    %v702 = vsel %vm541, %v701, %v697
    %v703 = vlaneseq
    %v704 = vshrl.u32 %v703, 7
    %v705 = vsub.s32 %v543, %v704
    %v706 = vrot.slane %v318, %v705
    %v707 = vsel %vm548, %v706, %v702
    %v708 = vlaneseq
    %v709 = vshrl.u32 %v708, 7
    %v710 = vsub.s32 %v440, %v709
    %v711 = vrot.slane %v321, %v710
    %v712 = vlaneseq
    %v713 = vshrl.u32 %v712, 7
    %v714 = vsub.s32 %v445, %v713
    %v715 = vrot.slane %v324, %v714
    %v716 = vsel %vm450, %v715, %v711
    %v717 = vlaneseq
    %v718 = vshrl.u32 %v717, 7
    %v719 = vsub.s32 %v452, %v718
    %v720 = vrot.slane %v327, %v719
    %v721 = vsel %vm457, %v720, %v716
    %v722 = vlaneseq
    %v723 = vshrl.u32 %v722, 7
    %v724 = vsub.s32 %v459, %v723
    %v725 = vrot.slane %v330, %v724
    %v726 = vsel %vm464, %v725, %v721
    %v727 = vlaneseq
    %v728 = vshrl.u32 %v727, 7
    %v729 = vsub.s32 %v466, %v728
    %v730 = vrot.slane %v333, %v729
    %v731 = vsel %vm471, %v730, %v726
    %v732 = vlaneseq
    %v733 = vshrl.u32 %v732, 7
    %v734 = vsub.s32 %v473, %v733
    %v735 = vrot.slane %v336, %v734
    %v736 = vsel %vm478, %v735, %v731
    %v737 = vlaneseq
    %v738 = vshrl.u32 %v737, 7
    %v739 = vsub.s32 %v480, %v738
    %v740 = vrot.slane %v339, %v739
    %v741 = vsel %vm485, %v740, %v736
    %v742 = vlaneseq
    %v743 = vshrl.u32 %v742, 7
    %v744 = vsub.s32 %v487, %v743
    %v745 = vrot.slane %v342, %v744
    %v746 = vsel %vm492, %v745, %v741
    %v747 = vlaneseq
    %v748 = vshrl.u32 %v747, 7
    %v749 = vsub.s32 %v494, %v748
    %v750 = vrot.slane %v345, %v749
    %v751 = vsel %vm499, %v750, %v746
    %v752 = vlaneseq
    %v753 = vshrl.u32 %v752, 7
    %v754 = vsub.s32 %v501, %v753
    %v755 = vrot.slane %v348, %v754
    %v756 = vsel %vm506, %v755, %v751
    %v757 = vlaneseq
    %v758 = vshrl.u32 %v757, 7
    %v759 = vsub.s32 %v508, %v758
    %v760 = vrot.slane %v351, %v759
    %v761 = vsel %vm513, %v760, %v756
    %v762 = vlaneseq
    %v763 = vshrl.u32 %v762, 7
    %v764 = vsub.s32 %v515, %v763
    %v765 = vrot.slane %v354, %v764
    %v766 = vsel %vm520, %v765, %v761
    %v767 = vlaneseq
    %v768 = vshrl.u32 %v767, 7
    %v769 = vsub.s32 %v522, %v768
    %v770 = vrot.slane %v357, %v769
    %v771 = vsel %vm527, %v770, %v766
    %v772 = vlaneseq
    %v773 = vshrl.u32 %v772, 7
    %v774 = vsub.s32 %v529, %v773
    %v775 = vrot.slane %v360, %v774
    %v776 = vsel %vm534, %v775, %v771
    %v777 = vlaneseq
    %v778 = vshrl.u32 %v777, 7
    %v779 = vsub.s32 %v536, %v778
    %v780 = vrot.slane %v363, %v779
    %v781 = vsel %vm541, %v780, %v776
    %v782 = vlaneseq
    %v783 = vshrl.u32 %v782, 7
    %v784 = vsub.s32 %v543, %v783
    %v785 = vrot.slane %v366, %v784
    %v786 = vsel %vm548, %v785, %v781
    %vm787 = vcmask 1041409
    %v788 = vsel %vm787, %v628, %v549
    %vm789 = vcmask 1042434
    %v790 = vsel %vm789, %v707, %v788
    %vm791 = vcmask 1043459
    %v792 = vsel %vm791, %v786, %v790
    %794 = vmatprep.subr.mxu0 0.0
    %795 = vmatpush1.xpose.msra.mxu0 %v367
    %796 = vmatprep.subr.mxu0 0.0
    %797 = vmatpush1.xpose.msra.mxu0 0.0
    %798 = vmatprep.subr.mxu0 0.0
    %799 = vmatpush1.xpose.msra.mxu0 0.0
    %800 = vmatprep.subr.mxu0 0.0
    %801 = vmatpush1.xpose.msra.mxu0 0.0
    %802 = vmatprep.subr.mxu0 0.0
    %803 = vmatpush1.xpose.msra.mxu0 0.0
    %804 = vmatprep.subr.mxu0 0.0
    %805 = vmatpush1.xpose.msra.mxu0 0.0
    %806 = vmatprep.subr.mxu0 0.0
    %807 = vmatpush1.xpose.msra.mxu0 0.0
    %808 = vmatprep.subr.mxu0 0.0
    %809 = vmatpush1.xpose.msra.mxu0 0.0
    %810 = vmatprep.subr.mxu0 0.0
    %811 = vmatpush1.xpose.msra.mxu0 0.0
    %812 = vmatprep.subr.mxu0 0.0
    %813 = vmatpush1.xpose.msra.mxu0 0.0
    %814 = vmatprep.subr.mxu0 0.0
    %815 = vmatpush1.xpose.msra.mxu0 0.0
    %816 = vmatprep.subr.mxu0 0.0
    %817 = vmatpush1.xpose.msra.mxu0 0.0
    %818 = vmatprep.subr.mxu0 0.0
    %819 = vmatpush1.xpose.msra.mxu0 0.0
    %820 = vmatprep.subr.mxu0 0.0
    %821 = vmatpush1.xpose.msra.mxu0 0.0
    %822 = vmatprep.subr.mxu0 0.0
    %823 = vmatpush1.xpose.msra.mxu0 0.0
    %824 = vmatprep.subr.mxu0 0.0
    %825 = vmatpush1.xpose.msra.mxu0 0.0
    %826 = vmatprep.subr.mxu0 0.0
    %827 = vmatpush1.xpose.msra.mxu0 0.0
    %828 = vmatprep.subr.mxu0 0.0
    %829 = vmatpush1.xpose.msra.mxu0 0.0
    %830 = vmatprep.subr.mxu0 0.0
    %831 = vmatpush1.xpose.msra.mxu0 0.0
    %832 = vmatprep.subr.mxu0 0.0
    %833 = vmatpush1.xpose.msra.mxu0 0.0
    %834 = vmatprep.subr.mxu0 0.0
    %835 = vmatpush1.xpose.msra.mxu0 0.0
    %836 = vmatprep.subr.mxu0 0.0
    %837 = vmatpush1.xpose.msra.mxu0 0.0
    %838 = vmatprep.subr.mxu0 0.0
    %839 = vmatpush1.xpose.msra.mxu0 0.0
    %840 = vmatprep.subr.mxu0 0.0
    %841 = vmatpush1.xpose.msra.mxu0 0.0
    %842 = vmatprep.subr.mxu0 0.0
    %843 = vmatpush1.xpose.msra.mxu0 0.0
    %844 = vmatprep.subr.mxu0 0.0
    %845 = vmatpush1.xpose.msra.mxu0 0.0
    %846 = vmatprep.subr.mxu0 0.0
    %847 = vmatpush1.xpose.msra.mxu0 0.0
    %848 = vmatprep.subr.mxu0 0.0
    %849 = vmatpush1.xpose.msra.mxu0 0.0
    %850 = vmatprep.subr.mxu0 0.0
    %851 = vmatpush1.xpose.msra.mxu0 0.0
    %852 = vmatprep.subr.mxu0 0.0
    %853 = vmatpush1.xpose.msra.mxu0 0.0
    %854 = vmatprep.subr.mxu0 0.0
    %855 = vmatpush1.xpose.msra.mxu0 0.0
    %856 = vmatprep.subr.mxu0 0.0
    %857 = vmatpush1.xpose.msra.mxu0 0.0
    %858 = vmatprep.mubr.f32.mxu0 0.0
    %859 = vmatmul.mubr.f32.gmra.mrb[0].mxu0 %v792
    %v860 = vpop.f32.mrb[0].mxu0
    %v861 = vadd.f32 %v373, %v860
    %v862 = vpop.f32.mrb[0].mxu0
    %863 = vdwg.mxu0
    %v864 = vmax.f32 %v861, 0.0
    %v865 = vld [vmem:[%s3] sm:$0xff]
    %v866 = vld [vmem:[%s4] sm:$0x1]
    %v868 = vlaneseq
    %v869 = vshrl.u32 %v868, 7
    %v870 = vsub.s32 0, %v869
    %v871 = vrot.slane %v866, %v870
    %vm873 = vcmask 64512
    %v875 = vsel %vm873, %v864, 0
    %877 = vmatprep.subr.mxu0 0.0
    %878 = vmatpush1.msra.mxu0 %v865
    %879 = vmatprep.subr.mxu0 0.0
    %880 = vmatpush1.msra.mxu0 0.0
    %881 = vmatprep.subr.mxu0 0.0
    %882 = vmatpush1.msra.mxu0 0.0
    %883 = vmatprep.subr.mxu0 0.0
    %884 = vmatpush1.msra.mxu0 0.0
    %885 = vmatprep.subr.mxu0 0.0
    %886 = vmatpush1.msra.mxu0 0.0
    %887 = vmatprep.subr.mxu0 0.0
    %888 = vmatpush1.msra.mxu0 0.0
    %889 = vmatprep.subr.mxu0 0.0
    %890 = vmatpush1.msra.mxu0 0.0
    %891 = vmatprep.subr.mxu0 0.0
    %892 = vmatpush1.msra.mxu0 0.0
    %893 = vmatprep.subr.mxu0 0.0
    %894 = vmatpush1.msra.mxu0 0.0
    %895 = vmatprep.subr.mxu0 0.0
    %896 = vmatpush1.msra.mxu0 0.0
    %897 = vmatprep.subr.mxu0 0.0
    %898 = vmatpush1.msra.mxu0 0.0
    %899 = vmatprep.subr.mxu0 0.0
    %900 = vmatpush1.msra.mxu0 0.0
    %901 = vmatprep.subr.mxu0 0.0
    %902 = vmatpush1.msra.mxu0 0.0
    %903 = vmatprep.subr.mxu0 0.0
    %904 = vmatpush1.msra.mxu0 0.0
    %905 = vmatprep.subr.mxu0 0.0
    %906 = vmatpush1.msra.mxu0 0.0
    %907 = vmatprep.subr.mxu0 0.0
    %908 = vmatpush1.msra.mxu0 0.0
    %909 = vmatprep.subr.mxu0 0.0
    %910 = vmatpush1.msra.mxu0 0.0
    %911 = vmatprep.subr.mxu0 0.0
    %912 = vmatpush1.msra.mxu0 0.0
    %913 = vmatprep.subr.mxu0 0.0
    %914 = vmatpush1.msra.mxu0 0.0
    %915 = vmatprep.subr.mxu0 0.0
    %916 = vmatpush1.msra.mxu0 0.0
    %917 = vmatprep.subr.mxu0 0.0
    %918 = vmatpush1.msra.mxu0 0.0
    %919 = vmatprep.subr.mxu0 0.0
    %920 = vmatpush1.msra.mxu0 0.0
    %921 = vmatprep.subr.mxu0 0.0
    %922 = vmatpush1.msra.mxu0 0.0
    %923 = vmatprep.subr.mxu0 0.0
    %924 = vmatpush1.msra.mxu0 0.0
    %925 = vmatprep.subr.mxu0 0.0
    %926 = vmatpush1.msra.mxu0 0.0
    %927 = vmatprep.subr.mxu0 0.0
    %928 = vmatpush1.msra.mxu0 0.0
    %929 = vmatprep.subr.mxu0 0.0
    %930 = vmatpush1.msra.mxu0 0.0
    %931 = vmatprep.subr.mxu0 0.0
    %932 = vmatpush1.msra.mxu0 0.0
    %933 = vmatprep.subr.mxu0 0.0
    %934 = vmatpush1.msra.mxu0 0.0
    %935 = vmatprep.subr.mxu0 0.0
    %936 = vmatpush1.msra.mxu0 0.0
    %937 = vmatprep.subr.mxu0 0.0
    %938 = vmatpush1.msra.mxu0 0.0
    %939 = vmatprep.subr.mxu0 0.0
    %940 = vmatpush1.msra.mxu0 0.0
    %941 = vmatprep.mubr.f32.mxu0 0.0
    %942 = vmatmul.mubr.f32.gmra.mrb[0].mxu0 %v875
    %v943 = vpop.f32.mrb[0].mxu0
    %v944 = vadd.f32 %v871, %v943
    %v945 = vpop.f32.mrb[0].mxu0
    %946 = vdwg.mxu0
    %v947 = vxor.u32 %v944, 2147483648
    %v948 = vmul.f32 %v947, 1.442695
    %v949 = vpow.pop %v948
    %v950 = vadd.f32 %v949, 1.0
    %v951 = vrcp.pop %v950
    %v952 = vmul.f32 1.0, %v951
    %v953 = vlaneseq
    %v954 = vshrl.u32 %v953, 7
    %v955 = vsub.s32 0, %v954
    %v956 = vrot.slane %v952, %v955
    %958 = vbcast.lane.b32.xlu0 %v956, 256
    %v959 = vpop.permute.xlu0 %958
    %s961 = sor.u32 256, 8
    %962 = vbcast.lane.b32.xlu0 %v956, %s961
    %v963 = vpop.permute.xlu0 %962
    %s965 = sor.u32 256, 16
    %966 = vbcast.lane.b32.xlu0 %v956, %s965
    %v967 = vpop.permute.xlu0 %966
    %s969 = sor.u32 256, 24
    %970 = vbcast.lane.b32.xlu0 %v956, %s969
    %v971 = vpop.permute.xlu0 %970
    %s973 = sor.u32 256, 32
    %974 = vbcast.lane.b32.xlu0 %v956, %s973
    %v975 = vpop.permute.xlu0 %974
    %s977 = sor.u32 256, 40
    %978 = vbcast.lane.b32.xlu0 %v956, %s977
    %v979 = vpop.permute.xlu0 %978
    %s981 = sor.u32 256, 48
    %982 = vbcast.lane.b32.xlu0 %v956, %s981
    %v983 = vpop.permute.xlu0 %982
    %s985 = sor.u32 256, 56
    %986 = vbcast.lane.b32.xlu0 %v956, %s985
    %v987 = vpop.permute.xlu0 %986
    %s989 = sor.u32 256, 64
    %990 = vbcast.lane.b32.xlu0 %v956, %s989
    %v991 = vpop.permute.xlu0 %990
    %s993 = sor.u32 256, 72
    %994 = vbcast.lane.b32.xlu0 %v956, %s993
    %v995 = vpop.permute.xlu0 %994
    %s997 = sor.u32 256, 80
    %998 = vbcast.lane.b32.xlu0 %v956, %s997
    %v999 = vpop.permute.xlu0 %998
    %s1001 = sor.u32 256, 88
    %1002 = vbcast.lane.b32.xlu0 %v956, %s1001
    %v1003 = vpop.permute.xlu0 %1002
    %s1005 = sor.u32 256, 96
    %1006 = vbcast.lane.b32.xlu0 %v956, %s1005
    %v1007 = vpop.permute.xlu0 %1006
    %s1009 = sor.u32 256, 104
    %1010 = vbcast.lane.b32.xlu0 %v956, %s1009
    %v1011 = vpop.permute.xlu0 %1010
    %s1013 = sor.u32 256, 112
    %1014 = vbcast.lane.b32.xlu0 %v956, %s1013
    %v1015 = vpop.permute.xlu0 %1014
    %s1017 = sor.u32 256, 120
    %1018 = vbcast.lane.b32.xlu0 %v956, %s1017
    %v1019 = vpop.permute.xlu0 %1018
    %v1020 = vlaneseq
    %v1021 = vshrl.u32 %v1020, 7
    %v1022 = vsub.s32 1, %v1021
    %v1023 = vrot.slane %v952, %v1022
    %1025 = vbcast.lane.b32.xlu0 %v1023, 256
    %v1026 = vpop.permute.xlu0 %1025
    %s1028 = sor.u32 256, 8
    %1029 = vbcast.lane.b32.xlu0 %v1023, %s1028
    %v1030 = vpop.permute.xlu0 %1029
    %s1032 = sor.u32 256, 16
    %1033 = vbcast.lane.b32.xlu0 %v1023, %s1032
    %v1034 = vpop.permute.xlu0 %1033
    %s1036 = sor.u32 256, 24
    %1037 = vbcast.lane.b32.xlu0 %v1023, %s1036
    %v1038 = vpop.permute.xlu0 %1037
    %s1040 = sor.u32 256, 32
    %1041 = vbcast.lane.b32.xlu0 %v1023, %s1040
    %v1042 = vpop.permute.xlu0 %1041
    %s1044 = sor.u32 256, 40
    %1045 = vbcast.lane.b32.xlu0 %v1023, %s1044
    %v1046 = vpop.permute.xlu0 %1045
    %s1048 = sor.u32 256, 48
    %1049 = vbcast.lane.b32.xlu0 %v1023, %s1048
    %v1050 = vpop.permute.xlu0 %1049
    %s1052 = sor.u32 256, 56
    %1053 = vbcast.lane.b32.xlu0 %v1023, %s1052
    %v1054 = vpop.permute.xlu0 %1053
    %s1056 = sor.u32 256, 64
    %1057 = vbcast.lane.b32.xlu0 %v1023, %s1056
    %v1058 = vpop.permute.xlu0 %1057
    %s1060 = sor.u32 256, 72
    %1061 = vbcast.lane.b32.xlu0 %v1023, %s1060
    %v1062 = vpop.permute.xlu0 %1061
    %s1064 = sor.u32 256, 80
    %1065 = vbcast.lane.b32.xlu0 %v1023, %s1064
    %v1066 = vpop.permute.xlu0 %1065
    %s1068 = sor.u32 256, 88
    %1069 = vbcast.lane.b32.xlu0 %v1023, %s1068
    %v1070 = vpop.permute.xlu0 %1069
    %s1072 = sor.u32 256, 96
    %1073 = vbcast.lane.b32.xlu0 %v1023, %s1072
    %v1074 = vpop.permute.xlu0 %1073
    %s1076 = sor.u32 256, 104
    %1077 = vbcast.lane.b32.xlu0 %v1023, %s1076
    %v1078 = vpop.permute.xlu0 %1077
    %s1080 = sor.u32 256, 112
    %1081 = vbcast.lane.b32.xlu0 %v1023, %s1080
    %v1082 = vpop.permute.xlu0 %1081
    %s1084 = sor.u32 256, 120
    %1085 = vbcast.lane.b32.xlu0 %v1023, %s1084
    %v1086 = vpop.permute.xlu0 %1085
    %v1087 = vlaneseq
    %v1088 = vshrl.u32 %v1087, 7
    %v1089 = vsub.s32 2, %v1088
    %v1090 = vrot.slane %v952, %v1089
    %1092 = vbcast.lane.b32.xlu0 %v1090, 256
    %v1093 = vpop.permute.xlu0 %1092
    %s1095 = sor.u32 256, 8
    %1096 = vbcast.lane.b32.xlu0 %v1090, %s1095
    %v1097 = vpop.permute.xlu0 %1096
    %s1099 = sor.u32 256, 16
    %1100 = vbcast.lane.b32.xlu0 %v1090, %s1099
    %v1101 = vpop.permute.xlu0 %1100
    %s1103 = sor.u32 256, 24
    %1104 = vbcast.lane.b32.xlu0 %v1090, %s1103
    %v1105 = vpop.permute.xlu0 %1104
    %s1107 = sor.u32 256, 32
    %1108 = vbcast.lane.b32.xlu0 %v1090, %s1107
    %v1109 = vpop.permute.xlu0 %1108
    %s1111 = sor.u32 256, 40
    %1112 = vbcast.lane.b32.xlu0 %v1090, %s1111
    %v1113 = vpop.permute.xlu0 %1112
    %s1115 = sor.u32 256, 48
    %1116 = vbcast.lane.b32.xlu0 %v1090, %s1115
    %v1117 = vpop.permute.xlu0 %1116
    %s1119 = sor.u32 256, 56
    %1120 = vbcast.lane.b32.xlu0 %v1090, %s1119
    %v1121 = vpop.permute.xlu0 %1120
    %s1123 = sor.u32 256, 64
    %1124 = vbcast.lane.b32.xlu0 %v1090, %s1123
    %v1125 = vpop.permute.xlu0 %1124
    %s1127 = sor.u32 256, 72
    %1128 = vbcast.lane.b32.xlu0 %v1090, %s1127
    %v1129 = vpop.permute.xlu0 %1128
    %s1131 = sor.u32 256, 80
    %1132 = vbcast.lane.b32.xlu0 %v1090, %s1131
    %v1133 = vpop.permute.xlu0 %1132
    %s1135 = sor.u32 256, 88
    %1136 = vbcast.lane.b32.xlu0 %v1090, %s1135
    %v1137 = vpop.permute.xlu0 %1136
    %s1139 = sor.u32 256, 96
    %1140 = vbcast.lane.b32.xlu0 %v1090, %s1139
    %v1141 = vpop.permute.xlu0 %1140
    %s1143 = sor.u32 256, 104
    %1144 = vbcast.lane.b32.xlu0 %v1090, %s1143
    %v1145 = vpop.permute.xlu0 %1144
    %s1147 = sor.u32 256, 112
    %1148 = vbcast.lane.b32.xlu0 %v1090, %s1147
    %v1149 = vpop.permute.xlu0 %1148
    %s1151 = sor.u32 256, 120
    %1152 = vbcast.lane.b32.xlu0 %v1090, %s1151
    %v1153 = vpop.permute.xlu0 %1152
    %v1154 = vlaneseq
    %v1155 = vshrl.u32 %v1154, 7
    %v1156 = vsub.s32 3, %v1155
    %v1157 = vrot.slane %v952, %v1156
    %1159 = vbcast.lane.b32.xlu0 %v1157, 256
    %v1160 = vpop.permute.xlu0 %1159
    %s1162 = sor.u32 256, 8
    %1163 = vbcast.lane.b32.xlu0 %v1157, %s1162
    %v1164 = vpop.permute.xlu0 %1163
    %s1166 = sor.u32 256, 16
    %1167 = vbcast.lane.b32.xlu0 %v1157, %s1166
    %v1168 = vpop.permute.xlu0 %1167
    %s1170 = sor.u32 256, 24
    %1171 = vbcast.lane.b32.xlu0 %v1157, %s1170
    %v1172 = vpop.permute.xlu0 %1171
    %s1174 = sor.u32 256, 32
    %1175 = vbcast.lane.b32.xlu0 %v1157, %s1174
    %v1176 = vpop.permute.xlu0 %1175
    %s1178 = sor.u32 256, 40
    %1179 = vbcast.lane.b32.xlu0 %v1157, %s1178
    %v1180 = vpop.permute.xlu0 %1179
    %s1182 = sor.u32 256, 48
    %1183 = vbcast.lane.b32.xlu0 %v1157, %s1182
    %v1184 = vpop.permute.xlu0 %1183
    %s1186 = sor.u32 256, 56
    %1187 = vbcast.lane.b32.xlu0 %v1157, %s1186
    %v1188 = vpop.permute.xlu0 %1187
    %s1190 = sor.u32 256, 64
    %1191 = vbcast.lane.b32.xlu0 %v1157, %s1190
    %v1192 = vpop.permute.xlu0 %1191
    %s1194 = sor.u32 256, 72
    %1195 = vbcast.lane.b32.xlu0 %v1157, %s1194
    %v1196 = vpop.permute.xlu0 %1195
    %s1198 = sor.u32 256, 80
    %1199 = vbcast.lane.b32.xlu0 %v1157, %s1198
    %v1200 = vpop.permute.xlu0 %1199
    %s1202 = sor.u32 256, 88
    %1203 = vbcast.lane.b32.xlu0 %v1157, %s1202
    %v1204 = vpop.permute.xlu0 %1203
    %s1206 = sor.u32 256, 96
    %1207 = vbcast.lane.b32.xlu0 %v1157, %s1206
    %v1208 = vpop.permute.xlu0 %1207
    %s1210 = sor.u32 256, 104
    %1211 = vbcast.lane.b32.xlu0 %v1157, %s1210
    %v1212 = vpop.permute.xlu0 %1211
    %s1214 = sor.u32 256, 112
    %1215 = vbcast.lane.b32.xlu0 %v1157, %s1214
    %v1216 = vpop.permute.xlu0 %1215
    %s1218 = sor.u32 256, 120
    %1219 = vbcast.lane.b32.xlu0 %v1157, %s1218
    %v1220 = vpop.permute.xlu0 %1219
    %v1221 = vmul.f32 %v47, %v959
    %v1222 = vmul.f32 %v48, %v959
    %v1223 = vmul.f32 %v49, %v963
    %v1224 = vmul.f32 %v50, %v963
    %v1225 = vmul.f32 %v51, %v967
    %v1226 = vmul.f32 %v52, %v967
    %v1227 = vmul.f32 %v53, %v971
    %v1228 = vmul.f32 %v54, %v971
    %v1229 = vmul.f32 %v55, %v975
    %v1230 = vmul.f32 %v56, %v975
    %v1231 = vmul.f32 %v57, %v979
    %v1232 = vmul.f32 %v58, %v979
    %v1233 = vmul.f32 %v59, %v983
    %v1234 = vmul.f32 %v60, %v983
    %v1235 = vmul.f32 %v61, %v987
    %v1236 = vmul.f32 %v62, %v987
    %v1237 = vmul.f32 %v63, %v991
    %v1238 = vmul.f32 %v64, %v991
    %v1239 = vmul.f32 %v65, %v995
    %v1240 = vmul.f32 %v66, %v995
    %v1241 = vmul.f32 %v67, %v999
    %v1242 = vmul.f32 %v68, %v999
    %v1243 = vmul.f32 %v69, %v1003
    %v1244 = vmul.f32 %v70, %v1003
    %v1245 = vmul.f32 %v71, %v1007
    %v1246 = vmul.f32 %v72, %v1007
    %v1247 = vmul.f32 %v73, %v1011
    %v1248 = vmul.f32 %v74, %v1011
    %v1249 = vmul.f32 %v75, %v1015
    %v1250 = vmul.f32 %v76, %v1015
    %v1251 = vmul.f32 %v77, %v1019
    %v1252 = vmul.f32 %v78, %v1019
    %v1253 = vmul.f32 %v79, %v1026
    %v1254 = vmul.f32 %v80, %v1026
    %v1255 = vmul.f32 %v81, %v1030
    %v1256 = vmul.f32 %v82, %v1030
    %v1257 = vmul.f32 %v83, %v1034
    %v1258 = vmul.f32 %v84, %v1034
    %v1259 = vmul.f32 %v85, %v1038
    %v1260 = vmul.f32 %v86, %v1038
    %v1261 = vmul.f32 %v87, %v1042
    %v1262 = vmul.f32 %v88, %v1042
    %v1263 = vmul.f32 %v89, %v1046
    %v1264 = vmul.f32 %v90, %v1046
    %v1265 = vmul.f32 %v91, %v1050
    %v1266 = vmul.f32 %v92, %v1050
    %v1267 = vmul.f32 %v93, %v1054
    %v1268 = vmul.f32 %v94, %v1054
    %v1269 = vmul.f32 %v95, %v1058
    %v1270 = vmul.f32 %v96, %v1058
    %v1271 = vmul.f32 %v97, %v1062
    %v1272 = vmul.f32 %v98, %v1062
    %v1273 = vmul.f32 %v99, %v1066
    %v1274 = vmul.f32 %v100, %v1066
    %v1275 = vmul.f32 %v101, %v1070
    %v1276 = vmul.f32 %v102, %v1070
    %v1277 = vmul.f32 %v103, %v1074
    %v1278 = vmul.f32 %v104, %v1074
    %v1279 = vmul.f32 %v105, %v1078
    %v1280 = vmul.f32 %v106, %v1078
    %v1281 = vmul.f32 %v107, %v1082
    %v1282 = vmul.f32 %v108, %v1082
    %v1283 = vmul.f32 %v109, %v1086
    %v1284 = vmul.f32 %v110, %v1086
    %v1285 = vmul.f32 %v111, %v1093
    %v1286 = vmul.f32 %v112, %v1093
    %v1287 = vmul.f32 %v113, %v1097
    %v1288 = vmul.f32 %v114, %v1097
    %v1289 = vmul.f32 %v115, %v1101
    %v1290 = vmul.f32 %v116, %v1101
    %v1291 = vmul.f32 %v117, %v1105
    %v1292 = vmul.f32 %v118, %v1105
    %v1293 = vmul.f32 %v119, %v1109
    %v1294 = vmul.f32 %v120, %v1109
    %v1295 = vmul.f32 %v121, %v1113
    %v1296 = vmul.f32 %v122, %v1113
    %v1297 = vmul.f32 %v123, %v1117
    %v1298 = vmul.f32 %v124, %v1117
    %v1299 = vmul.f32 %v125, %v1121
    %v1300 = vmul.f32 %v126, %v1121
    %v1301 = vmul.f32 %v127, %v1125
    %v1302 = vmul.f32 %v128, %v1125
    %v1303 = vmul.f32 %v129, %v1129
    %v1304 = vmul.f32 %v130, %v1129
    %v1305 = vmul.f32 %v131, %v1133
    %v1306 = vmul.f32 %v132, %v1133
    %v1307 = vmul.f32 %v133, %v1137
    %v1308 = vmul.f32 %v134, %v1137
    %v1309 = vmul.f32 %v135, %v1141
    %v1310 = vmul.f32 %v136, %v1141
    %v1311 = vmul.f32 %v137, %v1145
    %v1312 = vmul.f32 %v138, %v1145
    %v1313 = vmul.f32 %v139, %v1149
    %v1314 = vmul.f32 %v140, %v1149
    %v1315 = vmul.f32 %v141, %v1153
    %v1316 = vmul.f32 %v142, %v1153
    %v1317 = vmul.f32 %v143, %v1160
    %v1318 = vmul.f32 %v144, %v1160
    %v1319 = vmul.f32 %v145, %v1164
    %v1320 = vmul.f32 %v146, %v1164
    %v1321 = vmul.f32 %v147, %v1168
    %v1322 = vmul.f32 %v148, %v1168
    %v1323 = vmul.f32 %v149, %v1172
    %v1324 = vmul.f32 %v150, %v1172
    %v1325 = vmul.f32 %v151, %v1176
    %v1326 = vmul.f32 %v152, %v1176
    %v1327 = vmul.f32 %v153, %v1180
    %v1328 = vmul.f32 %v154, %v1180
    %v1329 = vmul.f32 %v155, %v1184
    %v1330 = vmul.f32 %v156, %v1184
    %v1331 = vmul.f32 %v157, %v1188
    %v1332 = vmul.f32 %v158, %v1188
    %v1333 = vmul.f32 %v159, %v1192
    %v1334 = vmul.f32 %v160, %v1192
    %v1335 = vmul.f32 %v161, %v1196
    %v1336 = vmul.f32 %v162, %v1196
    %v1337 = vmul.f32 %v163, %v1200
    %v1338 = vmul.f32 %v164, %v1200
    %v1339 = vmul.f32 %v165, %v1204
    %v1340 = vmul.f32 %v166, %v1204
    %v1341 = vmul.f32 %v167, %v1208
    %v1342 = vmul.f32 %v168, %v1208
    %v1343 = vmul.f32 %v169, %v1212
    %v1344 = vmul.f32 %v170, %v1212
    %v1345 = vmul.f32 %v171, %v1216
    %v1346 = vmul.f32 %v172, %v1216
    %v1347 = vmul.f32 %v173, %v1220
    %v1348 = vmul.f32 %v174, %v1220
    %1349 = vst [vmem:[#allocation7] sm:$0xff] %v1221
    %1350 = vst [vmem:[#allocation7 + $0x8] sm:$0xff] %v1222
    %1351 = vst [vmem:[#allocation7 + $0x10] sm:$0xff] %v1223
    %1352 = vst [vmem:[#allocation7 + $0x18] sm:$0xff] %v1224
    %1353 = vst [vmem:[#allocation7 + $0x20] sm:$0xff] %v1225
    %1354 = vst [vmem:[#allocation7 + $0x28] sm:$0xff] %v1226
    %1355 = vst [vmem:[#allocation7 + $0x30] sm:$0xff] %v1227
    %1356 = vst [vmem:[#allocation7 + $0x38] sm:$0xff] %v1228
    %1357 = vst [vmem:[#allocation7 + $0x40] sm:$0xff] %v1229
    %1358 = vst [vmem:[#allocation7 + $0x48] sm:$0xff] %v1230
    %1359 = vst [vmem:[#allocation7 + $0x50] sm:$0xff] %v1231
    %1360 = vst [vmem:[#allocation7 + $0x58] sm:$0xff] %v1232
    %1361 = vst [vmem:[#allocation7 + $0x60] sm:$0xff] %v1233
    %1362 = vst [vmem:[#allocation7 + $0x68] sm:$0xff] %v1234
    %1363 = vst [vmem:[#allocation7 + $0x70] sm:$0xff] %v1235
    %1364 = vst [vmem:[#allocation7 + $0x78] sm:$0xff] %v1236
    %1365 = vst [vmem:[#allocation7 + $0x80] sm:$0xff] %v1237
    %1366 = vst [vmem:[#allocation7 + $0x88] sm:$0xff] %v1238
    %1367 = vst [vmem:[#allocation7 + $0x90] sm:$0xff] %v1239
    %1368 = vst [vmem:[#allocation7 + $0x98] sm:$0xff] %v1240
    %1369 = vst [vmem:[#allocation7 + $0xa0] sm:$0xff] %v1241
    %1370 = vst [vmem:[#allocation7 + $0xa8] sm:$0xff] %v1242
    %1371 = vst [vmem:[#allocation7 + $0xb0] sm:$0xff] %v1243
    %1372 = vst [vmem:[#allocation7 + $0xb8] sm:$0xff] %v1244
    %1373 = vst [vmem:[#allocation7 + $0xc0] sm:$0xff] %v1245
    %1374 = vst [vmem:[#allocation7 + $0xc8] sm:$0xff] %v1246
    %1375 = vst [vmem:[#allocation7 + $0xd0] sm:$0xff] %v1247
    %1376 = vst [vmem:[#allocation7 + $0xd8] sm:$0xff] %v1248
    %1377 = vst [vmem:[#allocation7 + $0xe0] sm:$0xff] %v1249
    %1378 = vst [vmem:[#allocation7 + $0xe8] sm:$0xff] %v1250
    %1379 = vst [vmem:[#allocation7 + $0xf0] sm:$0xff] %v1251
    %1380 = vst [vmem:[#allocation7 + $0xf8] sm:$0xff] %v1252
    %1381 = vst [vmem:[#allocation7 + $0x100] sm:$0xff] %v1253
    %1382 = vst [vmem:[#allocation7 + $0x108] sm:$0xff] %v1254
    %1383 = vst [vmem:[#allocation7 + $0x110] sm:$0xff] %v1255
    %1384 = vst [vmem:[#allocation7 + $0x118] sm:$0xff] %v1256
    %1385 = vst [vmem:[#allocation7 + $0x120] sm:$0xff] %v1257
    %1386 = vst [vmem:[#allocation7 + $0x128] sm:$0xff] %v1258
    %1387 = vst [vmem:[#allocation7 + $0x130] sm:$0xff] %v1259
    %1388 = vst [vmem:[#allocation7 + $0x138] sm:$0xff] %v1260
    %1389 = vst [vmem:[#allocation7 + $0x140] sm:$0xff] %v1261
    %1390 = vst [vmem:[#allocation7 + $0x148] sm:$0xff] %v1262
    %1391 = vst [vmem:[#allocation7 + $0x150] sm:$0xff] %v1263
    %1392 = vst [vmem:[#allocation7 + $0x158] sm:$0xff] %v1264
    %1393 = vst [vmem:[#allocation7 + $0x160] sm:$0xff] %v1265
    %1394 = vst [vmem:[#allocation7 + $0x168] sm:$0xff] %v1266
    %1395 = vst [vmem:[#allocation7 + $0x170] sm:$0xff] %v1267
    %1396 = vst [vmem:[#allocation7 + $0x178] sm:$0xff] %v1268
    %1397 = vst [vmem:[#allocation7 + $0x180] sm:$0xff] %v1269
    %1398 = vst [vmem:[#allocation7 + $0x188] sm:$0xff] %v1270
    %1399 = vst [vmem:[#allocation7 + $0x190] sm:$0xff] %v1271
    %1400 = vst [vmem:[#allocation7 + $0x198] sm:$0xff] %v1272
    %1401 = vst [vmem:[#allocation7 + $0x1a0] sm:$0xff] %v1273
    %1402 = vst [vmem:[#allocation7 + $0x1a8] sm:$0xff] %v1274
    %1403 = vst [vmem:[#allocation7 + $0x1b0] sm:$0xff] %v1275
    %1404 = vst [vmem:[#allocation7 + $0x1b8] sm:$0xff] %v1276
    %1405 = vst [vmem:[#allocation7 + $0x1c0] sm:$0xff] %v1277
    %1406 = vst [vmem:[#allocation7 + $0x1c8] sm:$0xff] %v1278
    %1407 = vst [vmem:[#allocation7 + $0x1d0] sm:$0xff] %v1279
    %1408 = vst [vmem:[#allocation7 + $0x1d8] sm:$0xff] %v1280
    %1409 = vst [vmem:[#allocation7 + $0x1e0] sm:$0xff] %v1281
    %1410 = vst [vmem:[#allocation7 + $0x1e8] sm:$0xff] %v1282
    %1411 = vst [vmem:[#allocation7 + $0x1f0] sm:$0xff] %v1283
    %1412 = vst [vmem:[#allocation7 + $0x1f8] sm:$0xff] %v1284
    %1413 = vst [vmem:[#allocation7 + $0x200] sm:$0xff] %v1285
    %1414 = vst [vmem:[#allocation7 + $0x208] sm:$0xff] %v1286
    %1415 = vst [vmem:[#allocation7 + $0x210] sm:$0xff] %v1287
    %1416 = vst [vmem:[#allocation7 + $0x218] sm:$0xff] %v1288
    %1417 = vst [vmem:[#allocation7 + $0x220] sm:$0xff] %v1289
    %1418 = vst [vmem:[#allocation7 + $0x228] sm:$0xff] %v1290
    %1419 = vst [vmem:[#allocation7 + $0x230] sm:$0xff] %v1291
    %1420 = vst [vmem:[#allocation7 + $0x238] sm:$0xff] %v1292
    %1421 = vst [vmem:[#allocation7 + $0x240] sm:$0xff] %v1293
    %1422 = vst [vmem:[#allocation7 + $0x248] sm:$0xff] %v1294
    %1423 = vst [vmem:[#allocation7 + $0x250] sm:$0xff] %v1295
    %1424 = vst [vmem:[#allocation7 + $0x258] sm:$0xff] %v1296
    %1425 = vst [vmem:[#allocation7 + $0x260] sm:$0xff] %v1297
    %1426 = vst [vmem:[#allocation7 + $0x268] sm:$0xff] %v1298
    %1427 = vst [vmem:[#allocation7 + $0x270] sm:$0xff] %v1299
    %1428 = vst [vmem:[#allocation7 + $0x278] sm:$0xff] %v1300
    %1429 = vst [vmem:[#allocation7 + $0x280] sm:$0xff] %v1301
    %1430 = vst [vmem:[#allocation7 + $0x288] sm:$0xff] %v1302
    %1431 = vst [vmem:[#allocation7 + $0x290] sm:$0xff] %v1303
    %1432 = vst [vmem:[#allocation7 + $0x298] sm:$0xff] %v1304
    %1433 = vst [vmem:[#allocation7 + $0x2a0] sm:$0xff] %v1305
    %1434 = vst [vmem:[#allocation7 + $0x2a8] sm:$0xff] %v1306
    %1435 = vst [vmem:[#allocation7 + $0x2b0] sm:$0xff] %v1307
    %1436 = vst [vmem:[#allocation7 + $0x2b8] sm:$0xff] %v1308
    %1437 = vst [vmem:[#allocation7 + $0x2c0] sm:$0xff] %v1309
    %1438 = vst [vmem:[#allocation7 + $0x2c8] sm:$0xff] %v1310
    %1439 = vst [vmem:[#allocation7 + $0x2d0] sm:$0xff] %v1311
    %1440 = vst [vmem:[#allocation7 + $0x2d8] sm:$0xff] %v1312
    %1441 = vst [vmem:[#allocation7 + $0x2e0] sm:$0xff] %v1313
    %1442 = vst [vmem:[#allocation7 + $0x2e8] sm:$0xff] %v1314
    %1443 = vst [vmem:[#allocation7 + $0x2f0] sm:$0xff] %v1315
    %1444 = vst [vmem:[#allocation7 + $0x2f8] sm:$0xff] %v1316
    %1445 = vst [vmem:[#allocation7 + $0x300] sm:$0xff] %v1317
    %1446 = vst [vmem:[#allocation7 + $0x308] sm:$0xff] %v1318
    %1447 = vst [vmem:[#allocation7 + $0x310] sm:$0xff] %v1319
    %1448 = vst [vmem:[#allocation7 + $0x318] sm:$0xff] %v1320
    %1449 = vst [vmem:[#allocation7 + $0x320] sm:$0xff] %v1321
    %1450 = vst [vmem:[#allocation7 + $0x328] sm:$0xff] %v1322
    %1451 = vst [vmem:[#allocation7 + $0x330] sm:$0xff] %v1323
    %1452 = vst [vmem:[#allocation7 + $0x338] sm:$0xff] %v1324
    %1453 = vst [vmem:[#allocation7 + $0x340] sm:$0xff] %v1325
    %1454 = vst [vmem:[#allocation7 + $0x348] sm:$0xff] %v1326
    %1455 = vst [vmem:[#allocation7 + $0x350] sm:$0xff] %v1327
    %1456 = vst [vmem:[#allocation7 + $0x358] sm:$0xff] %v1328
    %1457 = vst [vmem:[#allocation7 + $0x360] sm:$0xff] %v1329
    %1458 = vst [vmem:[#allocation7 + $0x368] sm:$0xff] %v1330
    %1459 = vst [vmem:[#allocation7 + $0x370] sm:$0xff] %v1331
    %1460 = vst [vmem:[#allocation7 + $0x378] sm:$0xff] %v1332
    %1461 = vst [vmem:[#allocation7 + $0x380] sm:$0xff] %v1333
    %1462 = vst [vmem:[#allocation7 + $0x388] sm:$0xff] %v1334
    %1463 = vst [vmem:[#allocation7 + $0x390] sm:$0xff] %v1335
    %1464 = vst [vmem:[#allocation7 + $0x398] sm:$0xff] %v1336
    %1465 = vst [vmem:[#allocation7 + $0x3a0] sm:$0xff] %v1337
    %1466 = vst [vmem:[#allocation7 + $0x3a8] sm:$0xff] %v1338
    %1467 = vst [vmem:[#allocation7 + $0x3b0] sm:$0xff] %v1339
    %1468 = vst [vmem:[#allocation7 + $0x3b8] sm:$0xff] %v1340
    %1469 = vst [vmem:[#allocation7 + $0x3c0] sm:$0xff] %v1341
    %1470 = vst [vmem:[#allocation7 + $0x3c8] sm:$0xff] %v1342
    %1471 = vst [vmem:[#allocation7 + $0x3d0] sm:$0xff] %v1343
    %1472 = vst [vmem:[#allocation7 + $0x3d8] sm:$0xff] %v1344
    %1473 = vst [vmem:[#allocation7 + $0x3e0] sm:$0xff] %v1345
    %1474 = vst [vmem:[#allocation7 + $0x3e8] sm:$0xff] %v1346
    %1475 = vst [vmem:[#allocation7 + $0x3f0] sm:$0xff] %v1347
    %1476 = vst [vmem:[#allocation7 + $0x3f8] sm:$0xff] %v1348
    // Predicated region
    $region30: #{tpu_custom_call.1} parent=1 // pred_check
      _
    $region31: #{tpu_custom_call.1} parent=1 // pred_check_branch
      %1478 = sbr.rel (0) target = $region33
    $region32: #{tpu_custom_call.1} parent=1 // pred_region
      %s1480 = ssub.s32 16384, 16384
      %1481 = vsyncadd [#allocation4], %s1480
      %s1482 = sshll.u32 [#allocation7], 4
      %s1483 = int_to_ptr.vmem [resolvable:$true] %s1482
      %1488 = dma.vmem_to_hbm [thread:$0]  %s1483, 16384, %s5, [#allocation4], 256, 256, 16
    $region33: #{tpu_custom_call.1} parent=1 // pred_fallthru
      _
    // Predicated region
    $region34: #{tpu_custom_call.1} parent=1 // pred_check
      _
    $region35: #{tpu_custom_call.1} parent=1 // pred_check_branch
      %1490 = sbr.rel (0) target = $region37
    $region36: #{tpu_custom_call.1} parent=1 // pred_region
      %1491 = dma.done [#allocation4], 16384
    $region37: #{tpu_custom_call.1} parent=1 // pred_fallthru
      _
    %1492 = vsyncpa [#allocation3], 1
    %1493 = vsyncpa [#allocation6], 1
    %1494 = vsyncpa [#allocation4], 1

</llo_original>
